<compile_context>
chip_gen: v7x
topology: tpu7x:2x2x1
jax: 0.10.0
libtpu: 0.0.40
codegen_flags: <defaults>
</compile_context>

<pallas_src>
import jax
import jax.numpy as jnp
from jax import lax
from jax.experimental import pallas as pl
from jax.experimental.pallas import tpu as pltpu

BN_EPS = 1e-5


def _vmem_limit_bytes():
    # v5e/v6e: 128 MiB physical -> 96 MiB budget; v7x: 64 MiB physical -> 48 MiB budget.
    cap = 128 * 1024 * 1024
    try:
        cap = int(getattr(pltpu.get_tpu_info(), "vmem_capacity_bytes", cap) or cap)
    except Exception:
        pass
    return int(min(96 * 1024 * 1024, cap * 3 // 4))


def conv_block(x_nchw, w_conv, b_conv, gamma, beta):
    """x_nchw: (N, Cin, H, W); w_conv: (Cout, Cin, 3, 3). Returns (N, Cout, H//2, W//2).

    b_conv is accepted for API parity but unused: with BatchNorm in training mode the conv
    bias is exactly cancelled by the batch-mean subtraction (exact identity).
    """
    del b_conv
    N, Cin, H, W = x_nchw.shape
    Cout = w_conv.shape[0]
    assert H % 2 == 0 and W % 2 == 0, "MaxPool2d(2,2) needs even H, W"
    Hh, Wh = H // 2, W // 2
    Hp, Wp = Hh + 1, Wh + 1          # space-to-depth spatial dims of the padded input
    M = N * H * W                    # BN reduction size (train-mode batch stats)

    # ---- cheap, input-sized wrapper prep (no HBM im2col) --------------------------------
    # NHWC bf16 -> pad=1 -> space-to-depth with the 2x2 group as its OWN leading dim:
    #   xs[n, rp*2+cp, I, J, ci] == x_padded[n, 2I+rp, 2J+cp, ci]
    x = jnp.transpose(x_nchw, (0, 2, 3, 1)).astype(jnp.bfloat16)
    xp = jnp.pad(x, ((0, 0), (1, 1), (1, 1), (0, 0)))                # (N, H+2, W+2, Cin)
    xs = xp.reshape(N, Hp, 2, Wp, 2, Cin).transpose(0, 2, 4, 1, 3, 5)
    xs = xs.reshape(N, 4, Hp, Wp, Cin)
    # TODO(synk): with tiny Cin the lane dim is mostly padding; for production channel
    # counts (multiples of 32/64) this layout is fine, otherwise fold spatial onto lanes.

    # K-stacked conv weight: one (9*Cin, Cout) matrix; row block k = tap (ky, kx).
    wk = jnp.transpose(w_conv, (2, 3, 1, 0)).reshape(9 * Cin, Cout).astype(jnp.bfloat16)

    def tap_slices(ph, pw):
        """(group, row_off, col_off) source window for each of the 9 taps of parity (ph, pw)."""
        out = []
        for ky in range(3):
            a, rp = divmod(ph + ky, 2)
            for kx in range(3):
                b, cp = divmod(pw + kx, 2)
                out.append((rp * 2 + cp, a, b))
        return out

    # ---- kernel 1: conv (1 K-stacked matmul / parity) + BN partial sums + bf16 conv out --
    def conv_stats_kernel(xs_ref, wk_ref, conv_ref, st_ref):
        x_img = xs_ref[0]                                            # (4, Hp, Wp, Cin) bf16
        w = wk_ref[...]                                              # (9*Cin, Cout)  bf16
        s = jnp.zeros((1, Cout), jnp.float32)
        sq = jnp.zeros((1, Cout), jnp.float32)
        for ph in range(2):
            for pw in range(2):
                # Build the (Hh*Wh, 9*Cin) K-stacked operand from 9 shifted windows; each
                # reshape is a pure leading-dim merge (last dim untouched).
                taps = [
                    x_img[g, a:a + Hh, b:b + Wh, :].reshape(Hh * Wh, Cin)
                    for (g, a, b) in tap_slices(ph, pw)
                ]
                a_op = jnp.concatenate(taps, axis=-1)                # (Hh*Wh, 9*Cin)
                conv = jnp.dot(a_op, w, preferred_element_type=jnp.float32)
                conv_b = conv.astype(jnp.bfloat16)
                conv_ref[0, 2 * ph + pw] = conv_b                    # reused by pass 2
                # Fold this parity into the running sums immediately (one live accumulator)
                # from the same rounded values pass 2 will normalize.
                c32 = conv_b.astype(jnp.float32)
                s = s + jnp.sum(c32, axis=0, keepdims=True)
                sq = sq + jnp.sum(c32 * c32, axis=0, keepdims=True)
        st_ref[0, 0:1, :] = s
        st_ref[0, 1:2, :] = sq

    xs_spec = pl.BlockSpec((1, 4, Hp, Wp, Cin), lambda n: (n, 0, 0, 0, 0))
    wk_spec = pl.BlockSpec((9 * Cin, Cout), lambda n: (0, 0))
    conv_spec = pl.BlockSpec((1, 4, Hh * Wh, Cout), lambda n: (n, 0, 0, 0))
    cparams = pltpu.CompilerParams(dimension_semantics=("parallel",),
                                   vmem_limit_bytes=_vmem_limit_bytes())
    conv_flops = 2 * N * H * W * 9 * Cin * Cout
    conv_bytes = N * 4 * Hh * Wh * Cout * 2

    conv_hbm, stats = pl.pallas_call(
        conv_stats_kernel,
        out_shape=(jax.ShapeDtypeStruct((N, 4, Hh * Wh, Cout), jnp.bfloat16),
                   jax.ShapeDtypeStruct((N, 2, Cout), jnp.float32)),
        grid=(N,),
        in_specs=[xs_spec, wk_spec],
        out_specs=(conv_spec, pl.BlockSpec((1, 2, Cout), lambda n: (n, 0, 0))),
        compiler_params=cparams,
        cost_estimate=pl.CostEstimate(
            flops=conv_flops, transcendentals=0,
            bytes_accessed=xs.size * 2 + wk.size * 2 + conv_bytes + N * 2 * Cout * 4),
    )(xs, wk)

    # ---- fold BN into one per-channel scale/shift (tiny JAX math between the kernels) ----
    tot = jnp.sum(stats, axis=0)                        # (2, Cout)
    mean = tot[0] / M
    var = jnp.maximum(tot[1] / M - mean * mean, 0.0)    # biased, like PyTorch BN forward
    # TODO(synk): E[x^2]-E[x]^2 in f32 can cancel for |mean| >> std at very large N*H*W; a
    # shifted sum-of-squares would be more robust. Fine at these sizes.
    scale = (gamma.astype(jnp.float32) * lax.rsqrt(var + BN_EPS)).reshape(1, Cout)
    shift = (beta.astype(jnp.float32) - mean * scale[0]).reshape(1, Cout)
    # TODO(synk): BN running_mean/running_var buffer updates are omitted (they do not
    # affect the training-mode forward output reproduced here).

    # ---- kernel 2: pure elementwise BN FMA -> ReLU -> 2x2 max-pool (parity max) -----------
    def apply_kernel(conv_ref, scale_ref, shift_ref, o_ref):
        scale = scale_ref[...]        # (1, Cout) f32
        shift = shift_ref[...]        # (1, Cout) f32
        pooled = None
        for p in range(4):            # one parity live at a time
            y = jnp.maximum(conv_ref[0, p].astype(jnp.float32) * scale + shift, 0.0)
            pooled = y if pooled is None else jnp.maximum(pooled, y)
        # Single small transpose per image on the pooled tile only (conv is NOT recomputed
        # here); keeps the (Cout, Hh*Wh) output store lane-dense and NCHW a free reshape.
        o_ref[0] = pooled.T

    vec_spec = pl.BlockSpec((1, Cout), lambda n: (0, 0))
    pooled = pl.pallas_call(
        apply_kernel,
        out_shape=jax.ShapeDtypeStruct((N, Cout, Hh * Wh), jnp.float32),
        grid=(N,),
        in_specs=[conv_spec, vec_spec, vec_spec],
        out_specs=pl.BlockSpec((1, Cout, Hh * Wh), lambda n: (n, 0, 0)),
        compiler_params=cparams,
        cost_estimate=pl.CostEstimate(
            flops=4 * N * 4 * Hh * Wh * Cout, transcendentals=0,
            bytes_accessed=conv_bytes + 2 * Cout * 4 + N * Cout * Hh * Wh * 4),
    )(conv_hbm, scale, shift)
    # TODO(synk): for very small N on v7x, add a Cout- or spatial-tile grid axis so each
    # TensorCore gets several steps to software-pipeline.

    return pooled.reshape(N, Cout, Hh, Wh)              # already NCHW; free reshape


def reference(x, w, b, gamma, beta):
    """Pure-JAX reference mirroring the PyTorch forward."""
    conv = lax.conv_general_dilated(x, w, (1, 1), ((1, 1), (1, 1)),
                                    dimension_numbers=("NCHW", "OIHW", "NCHW"),
                                    precision=lax.Precision.HIGHEST)
    conv = conv + b.reshape(1, -1, 1, 1)
    mean = conv.mean(axis=(0, 2, 3), keepdims=True)
    var = conv.var(axis=(0, 2, 3), keepdims=True)       # biased, like PyTorch BN fwd
    y = (conv - mean) * lax.rsqrt(var + BN_EPS)
    y = y * gamma.reshape(1, -1, 1, 1) + beta.reshape(1, -1, 1, 1)
    y = jnp.maximum(y, 0.0)
    n, c, h, w_ = y.shape
    return y.reshape(n, c, h // 2, 2, w_ // 2, 2).max(axis=(3, 5))


if __name__ == "__main__":
    N, Cin, Cout, H, W = 2, 4, 8, 16, 16

    key = jax.random.PRNGKey(0)
    kx, kw, kb = jax.random.split(key, 3)
    x = jax.random.normal(kx, (N, Cin, H, W), dtype=jnp.float32)
    fan_in = Cin * 9
    w_conv = jax.random.normal(kw, (Cout, Cin, 3, 3), dtype=jnp.float32) / jnp.sqrt(fan_in)
    b_conv = 0.1 * jax.random.normal(kb, (Cout,), dtype=jnp.float32)
    gamma = jnp.ones((Cout,), dtype=jnp.float32)        # BatchNorm2d default init
    beta = jnp.zeros((Cout,), dtype=jnp.float32)

    out = jax.block_until_ready(conv_block(x, w_conv, b_conv, gamma, beta))
    ref = jax.block_until_ready(reference(x, w_conv, b_conv, gamma, beta))

    assert out.shape == (N, Cout, H // 2, W // 2), out.shape
    # tolerance accounts for bf16 MXU operands and the bf16 conv intermediate
    assert jnp.allclose(out, ref, atol=5e-2, rtol=5e-2), float(jnp.max(jnp.abs(out - ref)))
    print("KERNEL_OK")
</pallas_src>

<mosaic_0001>
module attributes {stable_mosaic.version = 11 : i64} {
  func.func @conv_stats_kernel(%arg0: i32, %arg1: memref<1x4x9x9x4xbf16, #tpu.memory_space<vmem>>, %arg2: memref<36x8xbf16, #tpu.memory_space<vmem>>, %arg3: memref<1x4x64x8xbf16, #tpu.memory_space<vmem>>, %arg4: memref<1x2x8xf32, #tpu.memory_space<vmem>>) attributes {dimension_semantics = [#tpu.dimension_semantics<parallel>], iteration_bounds = array<i64: 2>, scalar_prefetch = 0 : i64, scratch_operands = 0 : i64, tpu.core_type = #tpu.core_type<tc>, window_params = [{transform_indices = @transform_0, window_bounds = array<i64: 1, 4, 9, 9, 4>}, {pipeline_mode = #tpu.pipeline_mode<synchronous>, transform_indices = @transform_1, window_bounds = array<i64: 36, 8>}, {transform_indices = @transform_2, window_bounds = array<i64: 1, 4, 64, 8>}, {transform_indices = @transform_3, window_bounds = array<i64: 1, 2, 8>}]} {
    %c0 = arith.constant 0 : index
    %c0_0 = arith.constant 0 : index
    %c0_1 = arith.constant 0 : index
    %c0_2 = arith.constant 0 : index
    %c0_3 = arith.constant 0 : index
    %0 = vector.load %arg1[%c0, %c0_0, %c0_1, %c0_2, %c0_3] : memref<1x4x9x9x4xbf16, #tpu.memory_space<vmem>>, vector<1x4x9x9x4xbf16>
    %1 = vector.shape_cast %0 : vector<1x4x9x9x4xbf16> to vector<4x9x9x4xbf16>
    %c0_4 = arith.constant 0 : index
    %c0_5 = arith.constant 0 : index
    %2 = vector.load %arg2[%c0_4, %c0_5] : memref<36x8xbf16, #tpu.memory_space<vmem>>, vector<36x8xbf16>
    %cst = arith.constant 0.000000e+00 : f32
    %3 = vector.broadcast %cst : f32 to vector<1x8xf32>
    %cst_6 = arith.constant 0.000000e+00 : f32
    %4 = vector.broadcast %cst_6 : f32 to vector<1x8xf32>
    %5 = vector.extract_strided_slice %1 {offsets = [0, 0, 0, 0], sizes = [1, 8, 8, 4], strides = [1, 1, 1, 1]} : vector<4x9x9x4xbf16> to vector<1x8x8x4xbf16>
    %6 = vector.shape_cast %5 : vector<1x8x8x4xbf16> to vector<8x8x4xbf16>
    %7 = vector.shape_cast %6 : vector<8x8x4xbf16> to vector<64x4xbf16>
    %8 = vector.extract_strided_slice %1 {offsets = [1, 0, 0, 0], sizes = [1, 8, 8, 4], strides = [1, 1, 1, 1]} : vector<4x9x9x4xbf16> to vector<1x8x8x4xbf16>
    %9 = vector.shape_cast %8 : vector<1x8x8x4xbf16> to vector<8x8x4xbf16>
    %10 = vector.shape_cast %9 : vector<8x8x4xbf16> to vector<64x4xbf16>
    %11 = vector.extract_strided_slice %1 {offsets = [0, 0, 1, 0], sizes = [1, 8, 8, 4], strides = [1, 1, 1, 1]} : vector<4x9x9x4xbf16> to vector<1x8x8x4xbf16>
    %12 = vector.shape_cast %11 : vector<1x8x8x4xbf16> to vector<8x8x4xbf16>
    %13 = vector.shape_cast %12 : vector<8x8x4xbf16> to vector<64x4xbf16>
    %14 = vector.extract_strided_slice %1 {offsets = [2, 0, 0, 0], sizes = [1, 8, 8, 4], strides = [1, 1, 1, 1]} : vector<4x9x9x4xbf16> to vector<1x8x8x4xbf16>
    %15 = vector.shape_cast %14 : vector<1x8x8x4xbf16> to vector<8x8x4xbf16>
    %16 = vector.shape_cast %15 : vector<8x8x4xbf16> to vector<64x4xbf16>
    %17 = vector.extract_strided_slice %1 {offsets = [3, 0, 0, 0], sizes = [1, 8, 8, 4], strides = [1, 1, 1, 1]} : vector<4x9x9x4xbf16> to vector<1x8x8x4xbf16>
    %18 = vector.shape_cast %17 : vector<1x8x8x4xbf16> to vector<8x8x4xbf16>
    %19 = vector.shape_cast %18 : vector<8x8x4xbf16> to vector<64x4xbf16>
    %20 = vector.extract_strided_slice %1 {offsets = [2, 0, 1, 0], sizes = [1, 8, 8, 4], strides = [1, 1, 1, 1]} : vector<4x9x9x4xbf16> to vector<1x8x8x4xbf16>
    %21 = vector.shape_cast %20 : vector<1x8x8x4xbf16> to vector<8x8x4xbf16>
    %22 = vector.shape_cast %21 : vector<8x8x4xbf16> to vector<64x4xbf16>
    %23 = vector.extract_strided_slice %1 {offsets = [0, 1, 0, 0], sizes = [1, 8, 8, 4], strides = [1, 1, 1, 1]} : vector<4x9x9x4xbf16> to vector<1x8x8x4xbf16>
    %24 = vector.shape_cast %23 : vector<1x8x8x4xbf16> to vector<8x8x4xbf16>
    %25 = vector.shape_cast %24 : vector<8x8x4xbf16> to vector<64x4xbf16>
    %26 = vector.extract_strided_slice %1 {offsets = [1, 1, 0, 0], sizes = [1, 8, 8, 4], strides = [1, 1, 1, 1]} : vector<4x9x9x4xbf16> to vector<1x8x8x4xbf16>
    %27 = vector.shape_cast %26 : vector<1x8x8x4xbf16> to vector<8x8x4xbf16>
    %28 = vector.shape_cast %27 : vector<8x8x4xbf16> to vector<64x4xbf16>
    %29 = vector.extract_strided_slice %1 {offsets = [0, 1, 1, 0], sizes = [1, 8, 8, 4], strides = [1, 1, 1, 1]} : vector<4x9x9x4xbf16> to vector<1x8x8x4xbf16>
    %30 = vector.shape_cast %29 : vector<1x8x8x4xbf16> to vector<8x8x4xbf16>
    %31 = vector.shape_cast %30 : vector<8x8x4xbf16> to vector<64x4xbf16>
    %32 = tpu.concatenate %7, %10, %13, %16, %19, %22, %25, %28, %31 in 1 : vector<64x4xbf16>, vector<64x4xbf16>, vector<64x4xbf16>, vector<64x4xbf16>, vector<64x4xbf16>, vector<64x4xbf16>, vector<64x4xbf16>, vector<64x4xbf16>, vector<64x4xbf16> -> vector<64x36xbf16>
    %cst_7 = arith.constant dense<0.000000e+00> : vector<64x8xf32>
    %33 = tpu.matmul %32, %2, %cst_7 {dimension_numbers = #tpu.dot_dimension_numbers<[1], [0], [0], [1], [0, 0, 1, 1], [], []>} : vector<64x36xbf16>, vector<36x8xbf16>, vector<64x8xf32> -> vector<64x8xf32>
    %34 = arith.truncf %33 : vector<64x8xf32> to vector<64x8xbf16>
    %c0_8 = arith.constant 0 : index
    %c0_9 = arith.constant 0 : index
    %c0_10 = arith.constant 0 : index
    %c0_11 = arith.constant 0 : index
    %35 = vector.load %arg3[%c0_8, %c0_9, %c0_10, %c0_11] : memref<1x4x64x8xbf16, #tpu.memory_space<vmem>>, vector<1x1x64x8xbf16>
    %36 = vector.shape_cast %35 : vector<1x1x64x8xbf16> to vector<64x8xbf16>
    %37 = vector.shape_cast %34 : vector<64x8xbf16> to vector<1x1x64x8xbf16>
    tpu.vector_store %arg3[%c0_8, %c0_9, %c0_10, %c0_11], %37 {strides = array<i32>} : memref<1x4x64x8xbf16, #tpu.memory_space<vmem>>, vector<1x1x64x8xbf16>,
    %38 = arith.extf %34 : vector<64x8xbf16> to vector<64x8xf32>
    %cst_12 = arith.constant dense<0.000000e+00> : vector<8xf32>
    %39 = vector.multi_reduction <add>, %38, %cst_12 [0] : vector<64x8xf32> to vector<8xf32>
    %40 = vector.shape_cast %39 : vector<8xf32> to vector<1x8xf32>
    %41 = arith.addf %3, %40 : vector<1x8xf32>
    %42 = arith.mulf %38, %38 : vector<64x8xf32>
    %cst_13 = arith.constant dense<0.000000e+00> : vector<8xf32>
    %43 = vector.multi_reduction <add>, %42, %cst_13 [0] : vector<64x8xf32> to vector<8xf32>
    %44 = vector.shape_cast %43 : vector<8xf32> to vector<1x8xf32>
    %45 = arith.addf %4, %44 : vector<1x8xf32>
    %46 = vector.extract_strided_slice %1 {offsets = [1, 0, 0, 0], sizes = [1, 8, 8, 4], strides = [1, 1, 1, 1]} : vector<4x9x9x4xbf16> to vector<1x8x8x4xbf16>
    %47 = vector.shape_cast %46 : vector<1x8x8x4xbf16> to vector<8x8x4xbf16>
    %48 = vector.shape_cast %47 : vector<8x8x4xbf16> to vector<64x4xbf16>
    %49 = vector.extract_strided_slice %1 {offsets = [0, 0, 1, 0], sizes = [1, 8, 8, 4], strides = [1, 1, 1, 1]} : vector<4x9x9x4xbf16> to vector<1x8x8x4xbf16>
    %50 = vector.shape_cast %49 : vector<1x8x8x4xbf16> to vector<8x8x4xbf16>
    %51 = vector.shape_cast %50 : vector<8x8x4xbf16> to vector<64x4xbf16>
    %52 = vector.extract_strided_slice %1 {offsets = [1, 0, 1, 0], sizes = [1, 8, 8, 4], strides = [1, 1, 1, 1]} : vector<4x9x9x4xbf16> to vector<1x8x8x4xbf16>
    %53 = vector.shape_cast %52 : vector<1x8x8x4xbf16> to vector<8x8x4xbf16>
    %54 = vector.shape_cast %53 : vector<8x8x4xbf16> to vector<64x4xbf16>
    %55 = vector.extract_strided_slice %1 {offsets = [3, 0, 0, 0], sizes = [1, 8, 8, 4], strides = [1, 1, 1, 1]} : vector<4x9x9x4xbf16> to vector<1x8x8x4xbf16>
    %56 = vector.shape_cast %55 : vector<1x8x8x4xbf16> to vector<8x8x4xbf16>
    %57 = vector.shape_cast %56 : vector<8x8x4xbf16> to vector<64x4xbf16>
    %58 = vector.extract_strided_slice %1 {offsets = [2, 0, 1, 0], sizes = [1, 8, 8, 4], strides = [1, 1, 1, 1]} : vector<4x9x9x4xbf16> to vector<1x8x8x4xbf16>
    %59 = vector.shape_cast %58 : vector<1x8x8x4xbf16> to vector<8x8x4xbf16>
    %60 = vector.shape_cast %59 : vector<8x8x4xbf16> to vector<64x4xbf16>
    %61 = vector.extract_strided_slice %1 {offsets = [3, 0, 1, 0], sizes = [1, 8, 8, 4], strides = [1, 1, 1, 1]} : vector<4x9x9x4xbf16> to vector<1x8x8x4xbf16>
    %62 = vector.shape_cast %61 : vector<1x8x8x4xbf16> to vector<8x8x4xbf16>
    %63 = vector.shape_cast %62 : vector<8x8x4xbf16> to vector<64x4xbf16>
    %64 = vector.extract_strided_slice %1 {offsets = [1, 1, 0, 0], sizes = [1, 8, 8, 4], strides = [1, 1, 1, 1]} : vector<4x9x9x4xbf16> to vector<1x8x8x4xbf16>
    %65 = vector.shape_cast %64 : vector<1x8x8x4xbf16> to vector<8x8x4xbf16>
    %66 = vector.shape_cast %65 : vector<8x8x4xbf16> to vector<64x4xbf16>
    %67 = vector.extract_strided_slice %1 {offsets = [0, 1, 1, 0], sizes = [1, 8, 8, 4], strides = [1, 1, 1, 1]} : vector<4x9x9x4xbf16> to vector<1x8x8x4xbf16>
    %68 = vector.shape_cast %67 : vector<1x8x8x4xbf16> to vector<8x8x4xbf16>
    %69 = vector.shape_cast %68 : vector<8x8x4xbf16> to vector<64x4xbf16>
    %70 = vector.extract_strided_slice %1 {offsets = [1, 1, 1, 0], sizes = [1, 8, 8, 4], strides = [1, 1, 1, 1]} : vector<4x9x9x4xbf16> to vector<1x8x8x4xbf16>
    %71 = vector.shape_cast %70 : vector<1x8x8x4xbf16> to vector<8x8x4xbf16>
    %72 = vector.shape_cast %71 : vector<8x8x4xbf16> to vector<64x4xbf16>
    %73 = tpu.concatenate %48, %51, %54, %57, %60, %63, %66, %69, %72 in 1 : vector<64x4xbf16>, vector<64x4xbf16>, vector<64x4xbf16>, vector<64x4xbf16>, vector<64x4xbf16>, vector<64x4xbf16>, vector<64x4xbf16>, vector<64x4xbf16>, vector<64x4xbf16> -> vector<64x36xbf16>
    %cst_14 = arith.constant dense<0.000000e+00> : vector<64x8xf32>
    %74 = tpu.matmul %73, %2, %cst_14 {dimension_numbers = #tpu.dot_dimension_numbers<[1], [0], [0], [1], [0, 0, 1, 1], [], []>} : vector<64x36xbf16>, vector<36x8xbf16>, vector<64x8xf32> -> vector<64x8xf32>
    %75 = arith.truncf %74 : vector<64x8xf32> to vector<64x8xbf16>
    %c0_15 = arith.constant 0 : index
    %c1 = arith.constant 1 : index
    %c0_16 = arith.constant 0 : index
    %c0_17 = arith.constant 0 : index
    %76 = vector.load %arg3[%c0_15, %c1, %c0_16, %c0_17] : memref<1x4x64x8xbf16, #tpu.memory_space<vmem>>, vector<1x1x64x8xbf16>
    %77 = vector.shape_cast %76 : vector<1x1x64x8xbf16> to vector<64x8xbf16>
    %78 = vector.shape_cast %75 : vector<64x8xbf16> to vector<1x1x64x8xbf16>
    tpu.vector_store %arg3[%c0_15, %c1, %c0_16, %c0_17], %78 {strides = array<i32>} : memref<1x4x64x8xbf16, #tpu.memory_space<vmem>>, vector<1x1x64x8xbf16>,
    %79 = arith.extf %75 : vector<64x8xbf16> to vector<64x8xf32>
    %cst_18 = arith.constant dense<0.000000e+00> : vector<8xf32>
    %80 = vector.multi_reduction <add>, %79, %cst_18 [0] : vector<64x8xf32> to vector<8xf32>
    %81 = vector.shape_cast %80 : vector<8xf32> to vector<1x8xf32>
    %82 = arith.addf %41, %81 : vector<1x8xf32>
    %83 = arith.mulf %79, %79 : vector<64x8xf32>
    %cst_19 = arith.constant dense<0.000000e+00> : vector<8xf32>
    %84 = vector.multi_reduction <add>, %83, %cst_19 [0] : vector<64x8xf32> to vector<8xf32>
    %85 = vector.shape_cast %84 : vector<8xf32> to vector<1x8xf32>
    %86 = arith.addf %45, %85 : vector<1x8xf32>
    %87 = vector.extract_strided_slice %1 {offsets = [2, 0, 0, 0], sizes = [1, 8, 8, 4], strides = [1, 1, 1, 1]} : vector<4x9x9x4xbf16> to vector<1x8x8x4xbf16>
    %88 = vector.shape_cast %87 : vector<1x8x8x4xbf16> to vector<8x8x4xbf16>
    %89 = vector.shape_cast %88 : vector<8x8x4xbf16> to vector<64x4xbf16>
    %90 = vector.extract_strided_slice %1 {offsets = [3, 0, 0, 0], sizes = [1, 8, 8, 4], strides = [1, 1, 1, 1]} : vector<4x9x9x4xbf16> to vector<1x8x8x4xbf16>
    %91 = vector.shape_cast %90 : vector<1x8x8x4xbf16> to vector<8x8x4xbf16>
    %92 = vector.shape_cast %91 : vector<8x8x4xbf16> to vector<64x4xbf16>
    %93 = vector.extract_strided_slice %1 {offsets = [2, 0, 1, 0], sizes = [1, 8, 8, 4], strides = [1, 1, 1, 1]} : vector<4x9x9x4xbf16> to vector<1x8x8x4xbf16>
    %94 = vector.shape_cast %93 : vector<1x8x8x4xbf16> to vector<8x8x4xbf16>
    %95 = vector.shape_cast %94 : vector<8x8x4xbf16> to vector<64x4xbf16>
    %96 = vector.extract_strided_slice %1 {offsets = [0, 1, 0, 0], sizes = [1, 8, 8, 4], strides = [1, 1, 1, 1]} : vector<4x9x9x4xbf16> to vector<1x8x8x4xbf16>
    %97 = vector.shape_cast %96 : vector<1x8x8x4xbf16> to vector<8x8x4xbf16>
    %98 = vector.shape_cast %97 : vector<8x8x4xbf16> to vector<64x4xbf16>
    %99 = vector.extract_strided_slice %1 {offsets = [1, 1, 0, 0], sizes = [1, 8, 8, 4], strides = [1, 1, 1, 1]} : vector<4x9x9x4xbf16> to vector<1x8x8x4xbf16>
    %100 = vector.shape_cast %99 : vector<1x8x8x4xbf16> to vector<8x8x4xbf16>
    %101 = vector.shape_cast %100 : vector<8x8x4xbf16> to vector<64x4xbf16>
    %102 = vector.extract_strided_slice %1 {offsets = [0, 1, 1, 0], sizes = [1, 8, 8, 4], strides = [1, 1, 1, 1]} : vector<4x9x9x4xbf16> to vector<1x8x8x4xbf16>
    %103 = vector.shape_cast %102 : vector<1x8x8x4xbf16> to vector<8x8x4xbf16>
    %104 = vector.shape_cast %103 : vector<8x8x4xbf16> to vector<64x4xbf16>
    %105 = vector.extract_strided_slice %1 {offsets = [2, 1, 0, 0], sizes = [1, 8, 8, 4], strides = [1, 1, 1, 1]} : vector<4x9x9x4xbf16> to vector<1x8x8x4xbf16>
    %106 = vector.shape_cast %105 : vector<1x8x8x4xbf16> to vector<8x8x4xbf16>
    %107 = vector.shape_cast %106 : vector<8x8x4xbf16> to vector<64x4xbf16>
    %108 = vector.extract_strided_slice %1 {offsets = [3, 1, 0, 0], sizes = [1, 8, 8, 4], strides = [1, 1, 1, 1]} : vector<4x9x9x4xbf16> to vector<1x8x8x4xbf16>
    %109 = vector.shape_cast %108 : vector<1x8x8x4xbf16> to vector<8x8x4xbf16>
    %110 = vector.shape_cast %109 : vector<8x8x4xbf16> to vector<64x4xbf16>
    %111 = vector.extract_strided_slice %1 {offsets = [2, 1, 1, 0], sizes = [1, 8, 8, 4], strides = [1, 1, 1, 1]} : vector<4x9x9x4xbf16> to vector<1x8x8x4xbf16>
    %112 = vector.shape_cast %111 : vector<1x8x8x4xbf16> to vector<8x8x4xbf16>
    %113 = vector.shape_cast %112 : vector<8x8x4xbf16> to vector<64x4xbf16>
    %114 = tpu.concatenate %89, %92, %95, %98, %101, %104, %107, %110, %113 in 1 : vector<64x4xbf16>, vector<64x4xbf16>, vector<64x4xbf16>, vector<64x4xbf16>, vector<64x4xbf16>, vector<64x4xbf16>, vector<64x4xbf16>, vector<64x4xbf16>, vector<64x4xbf16> -> vector<64x36xbf16>
    %cst_20 = arith.constant dense<0.000000e+00> : vector<64x8xf32>
    %115 = tpu.matmul %114, %2, %cst_20 {dimension_numbers = #tpu.dot_dimension_numbers<[1], [0], [0], [1], [0, 0, 1, 1], [], []>} : vector<64x36xbf16>, vector<36x8xbf16>, vector<64x8xf32> -> vector<64x8xf32>
    %116 = arith.truncf %115 : vector<64x8xf32> to vector<64x8xbf16>
    %c0_21 = arith.constant 0 : index
    %c2 = arith.constant 2 : index
    %c0_22 = arith.constant 0 : index
    %c0_23 = arith.constant 0 : index
    %117 = vector.load %arg3[%c0_21, %c2, %c0_22, %c0_23] : memref<1x4x64x8xbf16, #tpu.memory_space<vmem>>, vector<1x1x64x8xbf16>
    %118 = vector.shape_cast %117 : vector<1x1x64x8xbf16> to vector<64x8xbf16>
    %119 = vector.shape_cast %116 : vector<64x8xbf16> to vector<1x1x64x8xbf16>
    tpu.vector_store %arg3[%c0_21, %c2, %c0_22, %c0_23], %119 {strides = array<i32>} : memref<1x4x64x8xbf16, #tpu.memory_space<vmem>>, vector<1x1x64x8xbf16>,
    %120 = arith.extf %116 : vector<64x8xbf16> to vector<64x8xf32>
    %cst_24 = arith.constant dense<0.000000e+00> : vector<8xf32>
    %121 = vector.multi_reduction <add>, %120, %cst_24 [0] : vector<64x8xf32> to vector<8xf32>
    %122 = vector.shape_cast %121 : vector<8xf32> to vector<1x8xf32>
    %123 = arith.addf %82, %122 : vector<1x8xf32>
    %124 = arith.mulf %120, %120 : vector<64x8xf32>
    %cst_25 = arith.constant dense<0.000000e+00> : vector<8xf32>
    %125 = vector.multi_reduction <add>, %124, %cst_25 [0] : vector<64x8xf32> to vector<8xf32>
    %126 = vector.shape_cast %125 : vector<8xf32> to vector<1x8xf32>
    %127 = arith.addf %86, %126 : vector<1x8xf32>
    %128 = vector.extract_strided_slice %1 {offsets = [3, 0, 0, 0], sizes = [1, 8, 8, 4], strides = [1, 1, 1, 1]} : vector<4x9x9x4xbf16> to vector<1x8x8x4xbf16>
    %129 = vector.shape_cast %128 : vector<1x8x8x4xbf16> to vector<8x8x4xbf16>
    %130 = vector.shape_cast %129 : vector<8x8x4xbf16> to vector<64x4xbf16>
    %131 = vector.extract_strided_slice %1 {offsets = [2, 0, 1, 0], sizes = [1, 8, 8, 4], strides = [1, 1, 1, 1]} : vector<4x9x9x4xbf16> to vector<1x8x8x4xbf16>
    %132 = vector.shape_cast %131 : vector<1x8x8x4xbf16> to vector<8x8x4xbf16>
    %133 = vector.shape_cast %132 : vector<8x8x4xbf16> to vector<64x4xbf16>
    %134 = vector.extract_strided_slice %1 {offsets = [3, 0, 1, 0], sizes = [1, 8, 8, 4], strides = [1, 1, 1, 1]} : vector<4x9x9x4xbf16> to vector<1x8x8x4xbf16>
    %135 = vector.shape_cast %134 : vector<1x8x8x4xbf16> to vector<8x8x4xbf16>
    %136 = vector.shape_cast %135 : vector<8x8x4xbf16> to vector<64x4xbf16>
    %137 = vector.extract_strided_slice %1 {offsets = [1, 1, 0, 0], sizes = [1, 8, 8, 4], strides = [1, 1, 1, 1]} : vector<4x9x9x4xbf16> to vector<1x8x8x4xbf16>
    %138 = vector.shape_cast %137 : vector<1x8x8x4xbf16> to vector<8x8x4xbf16>
    %139 = vector.shape_cast %138 : vector<8x8x4xbf16> to vector<64x4xbf16>
    %140 = vector.extract_strided_slice %1 {offsets = [0, 1, 1, 0], sizes = [1, 8, 8, 4], strides = [1, 1, 1, 1]} : vector<4x9x9x4xbf16> to vector<1x8x8x4xbf16>
    %141 = vector.shape_cast %140 : vector<1x8x8x4xbf16> to vector<8x8x4xbf16>
    %142 = vector.shape_cast %141 : vector<8x8x4xbf16> to vector<64x4xbf16>
    %143 = vector.extract_strided_slice %1 {offsets = [1, 1, 1, 0], sizes = [1, 8, 8, 4], strides = [1, 1, 1, 1]} : vector<4x9x9x4xbf16> to vector<1x8x8x4xbf16>
    %144 = vector.shape_cast %143 : vector<1x8x8x4xbf16> to vector<8x8x4xbf16>
    %145 = vector.shape_cast %144 : vector<8x8x4xbf16> to vector<64x4xbf16>
    %146 = vector.extract_strided_slice %1 {offsets = [3, 1, 0, 0], sizes = [1, 8, 8, 4], strides = [1, 1, 1, 1]} : vector<4x9x9x4xbf16> to vector<1x8x8x4xbf16>
    %147 = vector.shape_cast %146 : vector<1x8x8x4xbf16> to vector<8x8x4xbf16>
    %148 = vector.shape_cast %147 : vector<8x8x4xbf16> to vector<64x4xbf16>
    %149 = vector.extract_strided_slice %1 {offsets = [2, 1, 1, 0], sizes = [1, 8, 8, 4], strides = [1, 1, 1, 1]} : vector<4x9x9x4xbf16> to vector<1x8x8x4xbf16>
    %150 = vector.shape_cast %149 : vector<1x8x8x4xbf16> to vector<8x8x4xbf16>
    %151 = vector.shape_cast %150 : vector<8x8x4xbf16> to vector<64x4xbf16>
    %152 = vector.extract_strided_slice %1 {offsets = [3, 1, 1, 0], sizes = [1, 8, 8, 4], strides = [1, 1, 1, 1]} : vector<4x9x9x4xbf16> to vector<1x8x8x4xbf16>
    %153 = vector.shape_cast %152 : vector<1x8x8x4xbf16> to vector<8x8x4xbf16>
    %154 = vector.shape_cast %153 : vector<8x8x4xbf16> to vector<64x4xbf16>
    %155 = tpu.concatenate %130, %133, %136, %139, %142, %145, %148, %151, %154 in 1 : vector<64x4xbf16>, vector<64x4xbf16>, vector<64x4xbf16>, vector<64x4xbf16>, vector<64x4xbf16>, vector<64x4xbf16>, vector<64x4xbf16>, vector<64x4xbf16>, vector<64x4xbf16> -> vector<64x36xbf16>
    %cst_26 = arith.constant dense<0.000000e+00> : vector<64x8xf32>
    %156 = tpu.matmul %155, %2, %cst_26 {dimension_numbers = #tpu.dot_dimension_numbers<[1], [0], [0], [1], [0, 0, 1, 1], [], []>} : vector<64x36xbf16>, vector<36x8xbf16>, vector<64x8xf32> -> vector<64x8xf32>
    %157 = arith.truncf %156 : vector<64x8xf32> to vector<64x8xbf16>
    %c0_27 = arith.constant 0 : index
    %c3 = arith.constant 3 : index
    %c0_28 = arith.constant 0 : index
    %c0_29 = arith.constant 0 : index
    %158 = vector.load %arg3[%c0_27, %c3, %c0_28, %c0_29] : memref<1x4x64x8xbf16, #tpu.memory_space<vmem>>, vector<1x1x64x8xbf16>
    %159 = vector.shape_cast %158 : vector<1x1x64x8xbf16> to vector<64x8xbf16>
    %160 = vector.shape_cast %157 : vector<64x8xbf16> to vector<1x1x64x8xbf16>
    tpu.vector_store %arg3[%c0_27, %c3, %c0_28, %c0_29], %160 {strides = array<i32>} : memref<1x4x64x8xbf16, #tpu.memory_space<vmem>>, vector<1x1x64x8xbf16>,
    %161 = arith.extf %157 : vector<64x8xbf16> to vector<64x8xf32>
    %cst_30 = arith.constant dense<0.000000e+00> : vector<8xf32>
    %162 = vector.multi_reduction <add>, %161, %cst_30 [0] : vector<64x8xf32> to vector<8xf32>
    %163 = vector.shape_cast %162 : vector<8xf32> to vector<1x8xf32>
    %164 = arith.addf %123, %163 : vector<1x8xf32>
    %165 = arith.mulf %161, %161 : vector<64x8xf32>
    %cst_31 = arith.constant dense<0.000000e+00> : vector<8xf32>
    %166 = vector.multi_reduction <add>, %165, %cst_31 [0] : vector<64x8xf32> to vector<8xf32>
    %167 = vector.shape_cast %166 : vector<8xf32> to vector<1x8xf32>
    %168 = arith.addf %127, %167 : vector<1x8xf32>
    %c0_32 = arith.constant 0 : index
    %c0_33 = arith.constant 0 : index
    %c0_34 = arith.constant 0 : index
    %169 = vector.load %arg4[%c0_32, %c0_33, %c0_34] : memref<1x2x8xf32, #tpu.memory_space<vmem>>, vector<1x1x8xf32>
    %170 = vector.shape_cast %169 : vector<1x1x8xf32> to vector<1x8xf32>
    %171 = vector.shape_cast %164 : vector<1x8xf32> to vector<1x1x8xf32>
    tpu.vector_store %arg4[%c0_32, %c0_33, %c0_34], %171 {strides = array<i32>} : memref<1x2x8xf32, #tpu.memory_space<vmem>>, vector<1x1x8xf32>,
    %c0_35 = arith.constant 0 : index
    %c1_36 = arith.constant 1 : index
    %c0_37 = arith.constant 0 : index
    %172 = vector.load %arg4[%c0_35, %c1_36, %c0_37] : memref<1x2x8xf32, #tpu.memory_space<vmem>>, vector<1x1x8xf32>
    %173 = vector.shape_cast %172 : vector<1x1x8xf32> to vector<1x8xf32>
    %174 = vector.shape_cast %168 : vector<1x8xf32> to vector<1x1x8xf32>
    tpu.vector_store %arg4[%c0_35, %c1_36, %c0_37], %174 {strides = array<i32>} : memref<1x2x8xf32, #tpu.memory_space<vmem>>, vector<1x1x8xf32>,
    return
  }
  func.func @transform_0(%arg0: i32) -> (i32, i32, i32, i32, i32) {
    %c0_i32 = arith.constant 0 : i32
    %c0_i32_0 = arith.constant 0 : i32
    %c0_i32_1 = arith.constant 0 : i32
    %c0_i32_2 = arith.constant 0 : i32
    %c0_i32_3 = arith.constant 0 : i32
    return %arg0, %c0_i32, %c0_i32_0, %c0_i32_1, %c0_i32_2 : i32, i32, i32, i32, i32
  }
  func.func @transform_1(%arg0: i32) -> (i32, i32) {
    %c0_i32 = arith.constant 0 : i32
    %c0_i32_0 = arith.constant 0 : i32
    %c0_i32_1 = arith.constant 0 : i32
    return %c0_i32, %c0_i32_0 : i32, i32
  }
  func.func @transform_2(%arg0: i32) -> (i32, i32, i32, i32) {
    %c0_i32 = arith.constant 0 : i32
    %c0_i32_0 = arith.constant 0 : i32
    %c0_i32_1 = arith.constant 0 : i32
    %c0_i32_2 = arith.constant 0 : i32
    return %arg0, %c0_i32, %c0_i32_0, %c0_i32_1 : i32, i32, i32, i32
  }
  func.func @transform_3(%arg0: i32) -> (i32, i32, i32) {
    %c0_i32 = arith.constant 0 : i32
    %c0_i32_0 = arith.constant 0 : i32
    %c0_i32_1 = arith.constant 0 : i32
    return %arg0, %c0_i32, %c0_i32_0 : i32, i32, i32
  }
}

</mosaic_0001>

<llo_original>
// kernel: tpu_custom_call.1
$region0: #{tpu_custom_call.1}
  #allocation0 [shape = 'u32[]', space=smem, size = 0x4, offset = 0x4, fixed_abs, tag = 'smem constant byte address 0x4 - core index']
  #allocation1 [shape = 'u32[144,128]{1,0:T(1,128)}', space=vmem, size = 0x12000, scoped, tag = 'internal scratch']
  %s0 = inlined_call_operand.hbm [shape: bf16[2,4,9,9,4], index: 0, kind: input, shape index: {}]
  %s1 = inlined_call_operand.hbm [shape: bf16[36,8], index: 1, kind: input, shape index: {}]
  %s2 = inlined_call_operand.hbm [shape: bf16[2,4,64,8], index: 2, kind: output, shape index: {0}]
  %s3 = inlined_call_operand.hbm [shape: f32[2,2,8], index: 3, kind: output, shape index: {1}]
  %4 = xla_tuple %s2, %s3
  %s5 = sld [smem:[#allocation0]]
  $region57: #{tpu_custom_call.1} parent=0
    _
  %s7 = ssub.s32 1, %s5
  %s8 = scalar_select 0, %s7, %s5
  $region1: #{tpu_custom_call.1} parent=0
    #allocation2 [shape = 'u8[294912]{0}', space=vmem, size = 0x48000, scoped, tag = 'input window, operand 0']
    #allocation3 [shape = 's32[2]{0}', space=sflag, size = 0x8, scoped, tag = 'scoped memory for tpu_custom_call.1']
    #allocation4 [shape = 's32[2]{0}', space=sflag, size = 0x8, scoped, tag = 'scoped memory for tpu_custom_call.1']
    #allocation5 [shape = 'u8[10240]{0}', space=vmem, size = 0x2800, scoped, tag = 'input window, operand 1, single buffered']
    #allocation6 [shape = 's32[1]{0}', space=sflag, size = 0x4, scoped, tag = 'scoped memory for tpu_custom_call.1']
    #allocation7 [shape = 'u8[131072]{0}', space=vmem, size = 0x20000, scoped, tag = 'output window, operand 0']
    #allocation8 [shape = 'u8[2048]{0}', space=vmem, size = 0x800, scoped, tag = 'output window, operand 1']
    #allocation9 [shape = 's32[2]{0}', space=sflag, size = 0x8, scoped, tag = 'scoped memory for tpu_custom_call.1']
    %9 = vsyncpa [#allocation3], 0
    %s10 = scalar_lea.sflag [#allocation3], 1
    %11 = vsyncpa %s10, 0
    %12 = vsyncpa [#allocation6], 0
    %13 = vsyncpa [#allocation4], 0
    %s14 = scalar_lea.sflag [#allocation4], 1
    %15 = vsyncpa %s14, 0
    %16 = vsyncpa [#allocation9], 0
    %s17 = scalar_lea.sflag [#allocation9], 1
    %18 = vsyncpa %s17, 0
    loop: start=0, step=1, limit=4
    $region2: #{tpu_custom_call.1} parent=1 // loop_pre_header
      _
    $region3: #{tpu_custom_call.1} parent=1 // loop_header
      %s20 = sphi 0, %s24
      %p21 = scmp.ge.s32.totalorder %s20, 4
      %s30 = sphi 0, %s32
      %s33 = sphi 0, %s30
      %s34 = sphi 0, %s33
      %s50 = sphi 0, %s34
      %s54 = sphi 0, %s54
      %s56 = sphi 0, %s54
      %s57 = sphi 0, %s56
      %s71 = sphi 0, %s57
      %s77 = sphi 0, %s79
      %s80 = sphi 0, %s77
      %s81 = sphi 0, %s80
      %s97 = sphi 0, %s81
      %s103 = sphi 0, %s105
      %s106 = sphi 0, %s103
      %s107 = sphi 0, %s106
      %s123 = sphi 0, %s107
    $region4: #{tpu_custom_call.1} parent=1 // loop_header_branch
      %23 = sbr.rel (%p21) target = $region8
    $region5: #{tpu_custom_call.1} parent=1 // loop_body
      %s25 = ssub.s32 %s20, 1
      %s26 = ssub.s32 %s20, 2
      %s27 = sadd.s32 %s20, 1
      %s28 = ssub.s32 %s20, %s27
      %p29 = scmp.eq.s32.totalorder %s28, 0
      %s31 = sadd.s32 %s30, 1
      %s32 = scalar_select %p29, %s30, %s31
      %p35 = pneg %p29
      %p36 = scmp.eq.s32.totalorder %s20, 1
      %p37 = por %p35, %p36
      %p38 = scmp.ne.s32.totalorder %s30, %s33
      %p39 = scmp.eq.s32.totalorder %s20, 0
      %p40 = por %p38, %p39
      %p41 = scmp.ne.s32.totalorder %s30, %s33
      %p42 = scmp.eq.s32.totalorder %s25, 1
      %p43 = por %p41, %p42
      %p44 = scmp.ne.s32.totalorder %s33, %s34
      %p45 = scmp.eq.s32.totalorder %s25, 0
      %p46 = por %p44, %p45
      %p47 = scmp.ne.s32.totalorder %s33, %s34
      %p48 = scmp.eq.s32.totalorder %s26, 1
      %p49 = por %p47, %p48
      %p51 = scmp.ne.s32.totalorder %s34, %s50
      %p52 = scmp.eq.s32.totalorder %s26, 0
      %p53 = por %p51, %p52
      %s55 = sadd.s32 %s54, 1
      %p58 = scmp.eq.s32.totalorder %s20, 1
      %p59 = scmp.ne.s32.totalorder %s54, %s56
      %p60 = scmp.eq.s32.totalorder %s20, 0
      %p61 = por %p59, %p60
      %p62 = scmp.ne.s32.totalorder %s54, %s56
      %p63 = scmp.eq.s32.totalorder %s25, 1
      %p64 = por %p62, %p63
      %p65 = scmp.ne.s32.totalorder %s56, %s57
      %p66 = scmp.eq.s32.totalorder %s25, 0
      %p67 = por %p65, %p66
      %p68 = scmp.ne.s32.totalorder %s56, %s57
      %p69 = scmp.eq.s32.totalorder %s26, 1
      %p70 = por %p68, %p69
      %p72 = scmp.ne.s32.totalorder %s57, %s71
      %p73 = scmp.eq.s32.totalorder %s26, 0
      %p74 = por %p72, %p73
      %s75 = ssub.s32 %s20, %s27
      %p76 = scmp.eq.s32.totalorder %s75, 0
      %s78 = sadd.s32 %s77, 1
      %s79 = scalar_select %p76, %s77, %s78
      %p82 = pneg %p76
      %p83 = scmp.eq.s32.totalorder %s20, 1
      %p84 = por %p82, %p83
      %p85 = scmp.ne.s32.totalorder %s77, %s80
      %p86 = scmp.eq.s32.totalorder %s20, 0
      %p87 = por %p85, %p86
      %p88 = scmp.ne.s32.totalorder %s77, %s80
      %p89 = scmp.eq.s32.totalorder %s25, 1
      %p90 = por %p88, %p89
      %p91 = scmp.ne.s32.totalorder %s80, %s81
      %p92 = scmp.eq.s32.totalorder %s25, 0
      %p93 = por %p91, %p92
      %p94 = scmp.ne.s32.totalorder %s80, %s81
      %p95 = scmp.eq.s32.totalorder %s26, 1
      %p96 = por %p94, %p95
      %p98 = scmp.ne.s32.totalorder %s81, %s97
      %p99 = scmp.eq.s32.totalorder %s26, 0
      %p100 = por %p98, %p99
      %s101 = ssub.s32 %s20, %s27
      %p102 = scmp.eq.s32.totalorder %s101, 0
      %s104 = sadd.s32 %s103, 1
      %s105 = scalar_select %p102, %s103, %s104
      %p108 = pneg %p102
      %p109 = scmp.eq.s32.totalorder %s20, 1
      %p110 = por %p108, %p109
      %p111 = scmp.ne.s32.totalorder %s103, %s106
      %p112 = scmp.eq.s32.totalorder %s20, 0
      %p113 = por %p111, %p112
      %p114 = scmp.ne.s32.totalorder %s103, %s106
      %p115 = scmp.eq.s32.totalorder %s25, 1
      %p116 = por %p114, %p115
      %p117 = scmp.ne.s32.totalorder %s106, %s107
      %p118 = scmp.eq.s32.totalorder %s25, 0
      %p119 = por %p117, %p118
      %p120 = scmp.ne.s32.totalorder %s106, %s107
      %p121 = scmp.eq.s32.totalorder %s26, 1
      %p122 = por %p120, %p121
      %p124 = scmp.ne.s32.totalorder %s107, %s123
      %p125 = scmp.eq.s32.totalorder %s26, 0
      %p126 = por %p124, %p125
      %p127 = scmp.le.s32.totalorder 1, %s20
      %p128 = scmp.lt.s32.totalorder %s20, 3
      %p129 = pnand %p127, %p128
      %p130 = pneg %p129
      // Predicated region
      $region9: #{tpu_custom_call.1} parent=5 // pred_check
        _
      $region10: #{tpu_custom_call.1} parent=5 // pred_check_branch
        %132 = sbr.rel (%p129) target = $region12
      $region11: #{tpu_custom_call.1} parent=5 // pred_region
        %s133 = ssub.s32 %s20, 1
        // Predicated region
        $region13: #{tpu_custom_call.1} parent=11 // pred_check
          %p134 = pneg %p67
        $region14: #{tpu_custom_call.1} parent=11 // pred_check_branch
          %136 = sbr.rel (%p134) target = $region16
        $region15: #{tpu_custom_call.1} parent=11 // pred_region
          %s138 = ssub.s32 320, 320
          %139 = vsyncadd [#allocation6], %s138
          %s140 = sshll.u32 [#allocation5], 4
          %s141 = int_to_ptr.vmem [resolvable:$true] %s140
          %146 = dma.hbm_to_vmem [thread:$0]  %s1, 320, %s141, [#allocation6], 64, 64, 4
        $region16: #{tpu_custom_call.1} parent=11 // pred_fallthru
          _
      $region12: #{tpu_custom_call.1} parent=5 // pred_fallthru
        _
      %p147 = scmp.lt.s32.totalorder %s20, 2
      // Predicated region
      $region17: #{tpu_custom_call.1} parent=5 // pred_check
        %p148 = pneg %p147
      $region18: #{tpu_custom_call.1} parent=5 // pred_check_branch
        %150 = sbr.rel (%p148) target = $region20
      $region19: #{tpu_custom_call.1} parent=5 // pred_region
        // Predicated region
        $region21: #{tpu_custom_call.1} parent=19 // pred_check
          %p151 = pneg %p40
        $region22: #{tpu_custom_call.1} parent=19 // pred_check_branch
          %153 = sbr.rel (%p151) target = $region24
        $region23: #{tpu_custom_call.1} parent=19 // pred_region
          %s154 = sand.u32 %s30, 1
          %s155 = scalar_lea.sflag [#allocation3], %s154
          %s156 = sand.u32 %s30, 1
          %s157 = smul.addr %s156, 288
          %s158 = scalar_lea.vmem [#allocation2], %s157
          %s160 = ssub.s32 4608, 4608
          %161 = vsyncadd %s155, %s160
          %s162 = smul.addr %s20, 72
          %s163 = smul.addr %s162, 64
          %s164 = scalar_lea.hbm %s0, %s163
          %s165 = sshll.u32 %s158, 4
          %s166 = int_to_ptr.vmem [resolvable:$true] %s165
          %171 = dma.hbm_to_vmem [thread:$0]  %s164, 4608, %s166, %s155, 64, 64, 4
        $region24: #{tpu_custom_call.1} parent=19 // pred_fallthru
          _
      $region20: #{tpu_custom_call.1} parent=5 // pred_fallthru
        _
      %p172 = scmp.le.s32.totalorder 1, %s20
      %p173 = scmp.lt.s32.totalorder %s20, 3
      %p174 = pnand %p172, %p173
      %p175 = pneg %p174
      // Predicated region
      $region25: #{tpu_custom_call.1} parent=5 // pred_check
        _
      $region26: #{tpu_custom_call.1} parent=5 // pred_check_branch
        %177 = sbr.rel (%p174) target = $region28
      $region27: #{tpu_custom_call.1} parent=5 // pred_region
        %s178 = ssub.s32 %s20, 1
        %s179 = sand.u32 %s33, 1
        %s180 = scalar_lea.sflag [#allocation3], %s179
        %s181 = sand.u32 %s33, 1
        %s182 = smul.addr %s181, 288
        %s183 = scalar_lea.vmem [#allocation2], %s182
        // Predicated region
        $region29: #{tpu_custom_call.1} parent=27 // pred_check
          %p184 = pneg %p46
        $region30: #{tpu_custom_call.1} parent=27 // pred_check_branch
          %186 = sbr.rel (%p184) target = $region32
        $region31: #{tpu_custom_call.1} parent=27 // pred_region
          %187 = dma.done %s180, 4608
        $region32: #{tpu_custom_call.1} parent=27 // pred_fallthru
          _
        // Predicated region
        $region33: #{tpu_custom_call.1} parent=27 // pred_check
          %p188 = pneg %p67
        $region34: #{tpu_custom_call.1} parent=27 // pred_check_branch
          %190 = sbr.rel (%p188) target = $region36
        $region35: #{tpu_custom_call.1} parent=27 // pred_region
          %191 = dma.done [#allocation6], 320
        $region36: #{tpu_custom_call.1} parent=27 // pred_fallthru
          _
        %s192 = sand.u32 %s33, 1
        %s193 = scalar_lea.sflag [#allocation3], %s192
        %s194 = sand.u32 %s33, 1
        %s195 = smul.addr %s194, 288
        %s196 = scalar_lea.vmem [#allocation2], %s195
        %p197 = pneg %p46
        %p198 = pneg %p43
        %p199 = pneg %p67
        %p200 = pneg %p64
        %p201 = pneg %p93
        %p202 = pneg %p90
        %s203 = sand.u32 %s80, 1
        %s204 = scalar_lea.sflag [#allocation4], %s203
        %s205 = sand.u32 %s80, 1
        %s206 = smul.addr %s205, 128
        %s207 = scalar_lea.vmem [#allocation7], %s206
        %p208 = pneg %p119
        %p209 = pneg %p116
        %s210 = sand.u32 %s106, 1
        %s211 = scalar_lea.sflag [#allocation9], %s210
        %s212 = sand.u32 %s106, 1
        %s213 = smul.addr %s212, 2
        %s214 = scalar_lea.vmem [#allocation8], %s213
        %v216 = vld [vmem:[%s183] sm:$0xf]
        %v217 = vld [vmem:[%s183 + $0x4] sm:$0x1]
        %v218 = vld [vmem:[%s183 + $0x8] sm:$0xf]
        %v219 = vld [vmem:[%s183 + $0xc] sm:$0x1]
        %v220 = vld [vmem:[%s183 + $0x10] sm:$0xf]
        %v221 = vld [vmem:[%s183 + $0x14] sm:$0x1]
        %v222 = vld [vmem:[%s183 + $0x18] sm:$0xf]
        %v223 = vld [vmem:[%s183 + $0x1c] sm:$0x1]
        %v224 = vld [vmem:[%s183 + $0x20] sm:$0xf]
        %v225 = vld [vmem:[%s183 + $0x24] sm:$0x1]
        %v226 = vld [vmem:[%s183 + $0x28] sm:$0xf]
        %v227 = vld [vmem:[%s183 + $0x2c] sm:$0x1]
        %v228 = vld [vmem:[%s183 + $0x30] sm:$0xf]
        %v229 = vld [vmem:[%s183 + $0x34] sm:$0x1]
        %v230 = vld [vmem:[%s183 + $0x38] sm:$0xf]
        %v231 = vld [vmem:[%s183 + $0x3c] sm:$0x1]
        %v232 = vld [vmem:[%s183 + $0x40] sm:$0xf]
        %v233 = vld [vmem:[%s183 + $0x44] sm:$0x1]
        %v234 = vld [vmem:[%s183 + $0x48] sm:$0xf]
        %v235 = vld [vmem:[%s183 + $0x4c] sm:$0x1]
        %v236 = vld [vmem:[%s183 + $0x50] sm:$0xf]
        %v237 = vld [vmem:[%s183 + $0x54] sm:$0x1]
        %v238 = vld [vmem:[%s183 + $0x58] sm:$0xf]
        %v239 = vld [vmem:[%s183 + $0x5c] sm:$0x1]
        %v240 = vld [vmem:[%s183 + $0x60] sm:$0xf]
        %v241 = vld [vmem:[%s183 + $0x64] sm:$0x1]
        %v242 = vld [vmem:[%s183 + $0x68] sm:$0xf]
        %v243 = vld [vmem:[%s183 + $0x6c] sm:$0x1]
        %v244 = vld [vmem:[%s183 + $0x70] sm:$0xf]
        %v245 = vld [vmem:[%s183 + $0x74] sm:$0x1]
        %v246 = vld [vmem:[%s183 + $0x78] sm:$0xf]
        %v247 = vld [vmem:[%s183 + $0x7c] sm:$0x1]
        %v248 = vld [vmem:[%s183 + $0x80] sm:$0xf]
        %v249 = vld [vmem:[%s183 + $0x84] sm:$0x1]
        %v250 = vld [vmem:[%s183 + $0x88] sm:$0xf]
        %v251 = vld [vmem:[%s183 + $0x8c] sm:$0x1]
        %v252 = vld [vmem:[%s183 + $0x90] sm:$0xf]
        %v253 = vld [vmem:[%s183 + $0x94] sm:$0x1]
        %v254 = vld [vmem:[%s183 + $0x98] sm:$0xf]
        %v255 = vld [vmem:[%s183 + $0x9c] sm:$0x1]
        %v256 = vld [vmem:[%s183 + $0xa0] sm:$0xf]
        %v257 = vld [vmem:[%s183 + $0xa4] sm:$0x1]
        %v258 = vld [vmem:[%s183 + $0xa8] sm:$0xf]
        %v259 = vld [vmem:[%s183 + $0xac] sm:$0x1]
        %v260 = vld [vmem:[%s183 + $0xb0] sm:$0xf]
        %v261 = vld [vmem:[%s183 + $0xb4] sm:$0x1]
        %v262 = vld [vmem:[%s183 + $0xb8] sm:$0xf]
        %v263 = vld [vmem:[%s183 + $0xbc] sm:$0x1]
        %v264 = vld [vmem:[%s183 + $0xc0] sm:$0xf]
        %v265 = vld [vmem:[%s183 + $0xc4] sm:$0x1]
        %v266 = vld [vmem:[%s183 + $0xc8] sm:$0xf]
        %v267 = vld [vmem:[%s183 + $0xcc] sm:$0x1]
        %v268 = vld [vmem:[%s183 + $0xd0] sm:$0xf]
        %v269 = vld [vmem:[%s183 + $0xd4] sm:$0x1]
        %v270 = vld [vmem:[%s183 + $0xd8] sm:$0xf]
        %v271 = vld [vmem:[%s183 + $0xdc] sm:$0x1]
        %v272 = vld [vmem:[%s183 + $0xe0] sm:$0xf]
        %v273 = vld [vmem:[%s183 + $0xe4] sm:$0x1]
        %v274 = vld [vmem:[%s183 + $0xe8] sm:$0xf]
        %v275 = vld [vmem:[%s183 + $0xec] sm:$0x1]
        %v276 = vld [vmem:[%s183 + $0xf0] sm:$0xf]
        %v277 = vld [vmem:[%s183 + $0xf4] sm:$0x1]
        %v278 = vld [vmem:[%s183 + $0xf8] sm:$0xf]
        %v279 = vld [vmem:[%s183 + $0xfc] sm:$0x1]
        %v280 = vld [vmem:[%s183 + $0x100] sm:$0xf]
        %v281 = vld [vmem:[%s183 + $0x104] sm:$0x1]
        %v282 = vld [vmem:[%s183 + $0x108] sm:$0xf]
        %v283 = vld [vmem:[%s183 + $0x10c] sm:$0x1]
        %v284 = vld [vmem:[%s183 + $0x110] sm:$0xf]
        %v285 = vld [vmem:[%s183 + $0x114] sm:$0x1]
        %v286 = vld [vmem:[%s183 + $0x118] sm:$0xf]
        %v287 = vld [vmem:[%s183 + $0x11c] sm:$0x1]
        %v288 = vld [vmem:[#allocation5] sm:$0xf]
        %v289 = vld [vmem:[#allocation5 + $0x4] sm:$0xf]
        %v290 = vld [vmem:[#allocation5 + $0x8] sm:$0xf]
        %v291 = vld [vmem:[#allocation5 + $0xc] sm:$0xf]
        %v292 = vld [vmem:[#allocation5 + $0x10] sm:$0x3]
        %vm293 = vsmask.f32 3328
        %vm294 = vsmask.f32 7440
        %vm295 = vmor %vm293, %vm294
        %v297 = vshrl.u32 %v216, 16
        %v299 = vrot.slane %v297, 4
        %v300 = vshll.u32 %v216, 16
        %v302 = vrot.slane %v300, 5
        %v303 = vor.u32 %v299, %v302
        %v304 = vrot.slane %v303, 4
        %v306 = vshll.u32 %v217, 16
        %v308 = vrot.slane %v306, 5
        %v309 = vsel %vm295, %v304, %v308
        %v311 = vshrl.u32 %v218, 16
        %v313 = vrot.slane %v311, 4
        %v314 = vshll.u32 %v218, 16
        %v316 = vrot.slane %v314, 5
        %v317 = vor.u32 %v313, %v316
        %v318 = vrot.slane %v317, 4
        %v320 = vshll.u32 %v219, 16
        %v322 = vrot.slane %v320, 5
        %v323 = vsel %vm295, %v318, %v322
        %v325 = vshrl.u32 %v220, 16
        %v327 = vrot.slane %v325, 4
        %v328 = vshll.u32 %v220, 16
        %v330 = vrot.slane %v328, 5
        %v331 = vor.u32 %v327, %v330
        %v332 = vrot.slane %v331, 4
        %v334 = vshll.u32 %v221, 16
        %v336 = vrot.slane %v334, 5
        %v337 = vsel %vm295, %v332, %v336
        %v339 = vshrl.u32 %v222, 16
        %v341 = vrot.slane %v339, 4
        %v342 = vshll.u32 %v222, 16
        %v344 = vrot.slane %v342, 5
        %v345 = vor.u32 %v341, %v344
        %v346 = vrot.slane %v345, 4
        %v348 = vshll.u32 %v223, 16
        %v350 = vrot.slane %v348, 5
        %v351 = vsel %vm295, %v346, %v350
        %v353 = vshrl.u32 %v224, 16
        %v355 = vrot.slane %v353, 4
        %v356 = vshll.u32 %v224, 16
        %v358 = vrot.slane %v356, 5
        %v359 = vor.u32 %v355, %v358
        %v360 = vrot.slane %v359, 4
        %v362 = vshll.u32 %v225, 16
        %v364 = vrot.slane %v362, 5
        %v365 = vsel %vm295, %v360, %v364
        %v367 = vshrl.u32 %v226, 16
        %v369 = vrot.slane %v367, 4
        %v370 = vshll.u32 %v226, 16
        %v372 = vrot.slane %v370, 5
        %v373 = vor.u32 %v369, %v372
        %v374 = vrot.slane %v373, 4
        %v376 = vshll.u32 %v227, 16
        %v378 = vrot.slane %v376, 5
        %v379 = vsel %vm295, %v374, %v378
        %v381 = vshrl.u32 %v228, 16
        %v383 = vrot.slane %v381, 4
        %v384 = vshll.u32 %v228, 16
        %v386 = vrot.slane %v384, 5
        %v387 = vor.u32 %v383, %v386
        %v388 = vrot.slane %v387, 4
        %v390 = vshll.u32 %v229, 16
        %v392 = vrot.slane %v390, 5
        %v393 = vsel %vm295, %v388, %v392
        %v395 = vshrl.u32 %v230, 16
        %v397 = vrot.slane %v395, 4
        %v398 = vshll.u32 %v230, 16
        %v400 = vrot.slane %v398, 5
        %v401 = vor.u32 %v397, %v400
        %v402 = vrot.slane %v401, 4
        %v404 = vshll.u32 %v231, 16
        %v406 = vrot.slane %v404, 5
        %v407 = vsel %vm295, %v402, %v406
        %v409 = vshrl.u32 %v252, 16
        %v411 = vrot.slane %v409, 4
        %v412 = vshll.u32 %v252, 16
        %v414 = vrot.slane %v412, 5
        %v415 = vor.u32 %v411, %v414
        %v416 = vrot.slane %v415, 4
        %v418 = vshll.u32 %v253, 16
        %v420 = vrot.slane %v418, 5
        %v421 = vsel %vm295, %v416, %v420
        %v423 = vshrl.u32 %v254, 16
        %v425 = vrot.slane %v423, 4
        %v426 = vshll.u32 %v254, 16
        %v428 = vrot.slane %v426, 5
        %v429 = vor.u32 %v425, %v428
        %v430 = vrot.slane %v429, 4
        %v432 = vshll.u32 %v255, 16
        %v434 = vrot.slane %v432, 5
        %v435 = vsel %vm295, %v430, %v434
        %v437 = vshrl.u32 %v256, 16
        %v439 = vrot.slane %v437, 4
        %v440 = vshll.u32 %v256, 16
        %v442 = vrot.slane %v440, 5
        %v443 = vor.u32 %v439, %v442
        %v444 = vrot.slane %v443, 4
        %v446 = vshll.u32 %v257, 16
        %v448 = vrot.slane %v446, 5
        %v449 = vsel %vm295, %v444, %v448
        %v451 = vshrl.u32 %v258, 16
        %v453 = vrot.slane %v451, 4
        %v454 = vshll.u32 %v258, 16
        %v456 = vrot.slane %v454, 5
        %v457 = vor.u32 %v453, %v456
        %v458 = vrot.slane %v457, 4
        %v460 = vshll.u32 %v259, 16
        %v462 = vrot.slane %v460, 5
        %v463 = vsel %vm295, %v458, %v462
        %v465 = vshrl.u32 %v260, 16
        %v467 = vrot.slane %v465, 4
        %v468 = vshll.u32 %v260, 16
        %v470 = vrot.slane %v468, 5
        %v471 = vor.u32 %v467, %v470
        %v472 = vrot.slane %v471, 4
        %v474 = vshll.u32 %v261, 16
        %v476 = vrot.slane %v474, 5
        %v477 = vsel %vm295, %v472, %v476
        %v479 = vshrl.u32 %v262, 16
        %v481 = vrot.slane %v479, 4
        %v482 = vshll.u32 %v262, 16
        %v484 = vrot.slane %v482, 5
        %v485 = vor.u32 %v481, %v484
        %v486 = vrot.slane %v485, 4
        %v488 = vshll.u32 %v263, 16
        %v490 = vrot.slane %v488, 5
        %v491 = vsel %vm295, %v486, %v490
        %v493 = vshrl.u32 %v264, 16
        %v495 = vrot.slane %v493, 4
        %v496 = vshll.u32 %v264, 16
        %v498 = vrot.slane %v496, 5
        %v499 = vor.u32 %v495, %v498
        %v500 = vrot.slane %v499, 4
        %v502 = vshll.u32 %v265, 16
        %v504 = vrot.slane %v502, 5
        %v505 = vsel %vm295, %v500, %v504
        %v507 = vshrl.u32 %v266, 16
        %v509 = vrot.slane %v507, 4
        %v510 = vshll.u32 %v266, 16
        %v512 = vrot.slane %v510, 5
        %v513 = vor.u32 %v509, %v512
        %v514 = vrot.slane %v513, 4
        %v516 = vshll.u32 %v267, 16
        %v518 = vrot.slane %v516, 5
        %v519 = vsel %vm295, %v514, %v518
        %v521 = vshrl.u32 %v232, 16
        %v523 = vrot.slane %v521, 4
        %v524 = vshll.u32 %v232, 16
        %v526 = vrot.slane %v524, 5
        %v527 = vor.u32 %v523, %v526
        %v528 = vrot.slane %v527, 4
        %v530 = vshll.u32 %v233, 16
        %v532 = vrot.slane %v530, 5
        %v533 = vsel %vm295, %v528, %v532
        %v542 = vunpack.c.l.b16 %v216
        %v543 = vunpack.c.l.b16 %v218
        %v544 = vunpack.c.l.b16 %v220
        %v545 = vunpack.c.l.b16 %v222
        %v546 = vunpack.c.l.b16 %v224
        %v547 = vunpack.c.l.b16 %v226
        %v548 = vunpack.c.l.b16 %v228
        %v549 = vunpack.c.l.b16 %v230
        %v550 = vpack.c.b16 %v543, %v542
        %v551 = vpack.c.b16 %v545, %v544
        %v552 = vpack.c.b16 %v547, %v546
        %v553 = vpack.c.b16 %v549, %v548
        %v562 = vunpack.c.l.b16 %v234
        %v563 = vunpack.c.l.b16 %v236
        %v564 = vunpack.c.l.b16 %v238
        %v565 = vunpack.c.l.b16 %v240
        %v566 = vunpack.c.l.b16 %v242
        %v567 = vunpack.c.l.b16 %v244
        %v568 = vunpack.c.l.b16 %v246
        %v569 = vunpack.c.l.b16 %v248
        %v570 = vpack.c.b16 %v563, %v562
        %v571 = vpack.c.b16 %v565, %v564
        %v572 = vpack.c.b16 %v567, %v566
        %v573 = vpack.c.b16 %v569, %v568
        %574 = vrot.lane.b32.xlu0 %v570, 4
        %v575 = vpop.permute.xlu0 %574
        %576 = vrot.lane.b32.xlu0 %v571, 4
        %v577 = vpop.permute.xlu0 %576
        %578 = vrot.lane.b32.xlu0 %v572, 4
        %v579 = vpop.permute.xlu0 %578
        %580 = vrot.lane.b32.xlu0 %v573, 4
        %v581 = vpop.permute.xlu0 %580
        %v582 = vunpack.c.l.b16 %v309
        %v583 = vunpack.c.l.b16 %v323
        %v584 = vunpack.c.l.b16 %v337
        %v585 = vunpack.c.l.b16 %v351
        %v586 = vunpack.c.l.b16 %v365
        %v587 = vunpack.c.l.b16 %v379
        %v588 = vunpack.c.l.b16 %v393
        %v589 = vunpack.c.l.b16 %v407
        %v590 = vpack.c.b16 %v583, %v582
        %v591 = vpack.c.b16 %v585, %v584
        %v592 = vpack.c.b16 %v587, %v586
        %v593 = vpack.c.b16 %v589, %v588
        %594 = vrot.lane.b32.xlu0 %v590, 8
        %v595 = vpop.permute.xlu0 %594
        %596 = vrot.lane.b32.xlu0 %v591, 8
        %v597 = vpop.permute.xlu0 %596
        %598 = vrot.lane.b32.xlu0 %v592, 8
        %v599 = vpop.permute.xlu0 %598
        %600 = vrot.lane.b32.xlu0 %v593, 8
        %v601 = vpop.permute.xlu0 %600
        %v610 = vunpack.c.l.b16 %v252
        %v611 = vunpack.c.l.b16 %v254
        %v612 = vunpack.c.l.b16 %v256
        %v613 = vunpack.c.l.b16 %v258
        %v614 = vunpack.c.l.b16 %v260
        %v615 = vunpack.c.l.b16 %v262
        %v616 = vunpack.c.l.b16 %v264
        %v617 = vunpack.c.l.b16 %v266
        %v618 = vpack.c.b16 %v611, %v610
        %v619 = vpack.c.b16 %v613, %v612
        %v620 = vpack.c.b16 %v615, %v614
        %v621 = vpack.c.b16 %v617, %v616
        %622 = vrot.lane.b32.xlu0 %v618, 12
        %v623 = vpop.permute.xlu0 %622
        %624 = vrot.lane.b32.xlu0 %v619, 12
        %v625 = vpop.permute.xlu0 %624
        %626 = vrot.lane.b32.xlu0 %v620, 12
        %v627 = vpop.permute.xlu0 %626
        %628 = vrot.lane.b32.xlu0 %v621, 12
        %v629 = vpop.permute.xlu0 %628
        %v638 = vunpack.c.l.b16 %v270
        %v639 = vunpack.c.l.b16 %v272
        %v640 = vunpack.c.l.b16 %v274
        %v641 = vunpack.c.l.b16 %v276
        %v642 = vunpack.c.l.b16 %v278
        %v643 = vunpack.c.l.b16 %v280
        %v644 = vunpack.c.l.b16 %v282
        %v645 = vunpack.c.l.b16 %v284
        %v646 = vpack.c.b16 %v639, %v638
        %v647 = vpack.c.b16 %v641, %v640
        %v648 = vpack.c.b16 %v643, %v642
        %v649 = vpack.c.b16 %v645, %v644
        %650 = vrot.lane.b32.xlu0 %v646, 16
        %v651 = vpop.permute.xlu0 %650
        %652 = vrot.lane.b32.xlu0 %v647, 16
        %v653 = vpop.permute.xlu0 %652
        %654 = vrot.lane.b32.xlu0 %v648, 16
        %v655 = vpop.permute.xlu0 %654
        %656 = vrot.lane.b32.xlu0 %v649, 16
        %v657 = vpop.permute.xlu0 %656
        %v658 = vunpack.c.l.b16 %v421
        %v659 = vunpack.c.l.b16 %v435
        %v660 = vunpack.c.l.b16 %v449
        %v661 = vunpack.c.l.b16 %v463
        %v662 = vunpack.c.l.b16 %v477
        %v663 = vunpack.c.l.b16 %v491
        %v664 = vunpack.c.l.b16 %v505
        %v665 = vunpack.c.l.b16 %v519
        %v666 = vpack.c.b16 %v659, %v658
        %v667 = vpack.c.b16 %v661, %v660
        %v668 = vpack.c.b16 %v663, %v662
        %v669 = vpack.c.b16 %v665, %v664
        %670 = vrot.lane.b32.xlu0 %v666, 20
        %v671 = vpop.permute.xlu0 %670
        %672 = vrot.lane.b32.xlu0 %v667, 20
        %v673 = vpop.permute.xlu0 %672
        %674 = vrot.lane.b32.xlu0 %v668, 20
        %v675 = vpop.permute.xlu0 %674
        %676 = vrot.lane.b32.xlu0 %v669, 20
        %v677 = vpop.permute.xlu0 %676
        %v679 = vunpack.c.l.b16 %v232
        %v680 = vpack.c.b16 %v544, %v543
        %v681 = vpack.c.b16 %v546, %v545
        %v682 = vpack.c.b16 %v548, %v547
        %v683 = vpack.c.b16 %v679, %v549
        %684 = vrot.lane.b32.xlu0 %v680, 24
        %v685 = vpop.permute.xlu0 %684
        %686 = vrot.lane.b32.xlu0 %v681, 24
        %v687 = vpop.permute.xlu0 %686
        %688 = vrot.lane.b32.xlu0 %v682, 24
        %v689 = vpop.permute.xlu0 %688
        %690 = vrot.lane.b32.xlu0 %v683, 24
        %v691 = vpop.permute.xlu0 %690
        %v693 = vunpack.c.l.b16 %v250
        %v694 = vpack.c.b16 %v564, %v563
        %v695 = vpack.c.b16 %v566, %v565
        %v696 = vpack.c.b16 %v568, %v567
        %v697 = vpack.c.b16 %v693, %v569
        %698 = vrot.lane.b32.xlu0 %v694, 28
        %v699 = vpop.permute.xlu0 %698
        %700 = vrot.lane.b32.xlu0 %v695, 28
        %v701 = vpop.permute.xlu0 %700
        %702 = vrot.lane.b32.xlu0 %v696, 28
        %v703 = vpop.permute.xlu0 %702
        %704 = vrot.lane.b32.xlu0 %v697, 28
        %v705 = vpop.permute.xlu0 %704
        %v706 = vunpack.c.l.b16 %v533
        %v707 = vpack.c.b16 %v584, %v583
        %v708 = vpack.c.b16 %v586, %v585
        %v709 = vpack.c.b16 %v588, %v587
        %v710 = vpack.c.b16 %v706, %v589
        %711 = vrot.lane.b32.xlu0 %v707, 32
        %v712 = vpop.permute.xlu0 %711
        %713 = vrot.lane.b32.xlu0 %v708, 32
        %v714 = vpop.permute.xlu0 %713
        %715 = vrot.lane.b32.xlu0 %v709, 32
        %v716 = vpop.permute.xlu0 %715
        %717 = vrot.lane.b32.xlu0 %v710, 32
        %v718 = vpop.permute.xlu0 %717
        %vm719 = vcmask 31744
        %v722 = vsel %vm719, %v550, %v575
        %v725 = vsel %vm719, %v551, %v577
        %v728 = vsel %vm719, %v552, %v579
        %v731 = vsel %vm719, %v553, %v581
        %vm732 = vcmask 64512
        %v734 = vsel %vm732, %v722, %v595
        %v736 = vsel %vm732, %v725, %v597
        %v738 = vsel %vm732, %v728, %v599
        %v740 = vsel %vm732, %v731, %v601
        %vm741 = vcmask 97280
        %v743 = vsel %vm741, %v734, %v623
        %v745 = vsel %vm741, %v736, %v625
        %v747 = vsel %vm741, %v738, %v627
        %v749 = vsel %vm741, %v740, %v629
        %vm750 = vcmask 130048
        %v752 = vsel %vm750, %v743, %v651
        %v754 = vsel %vm750, %v745, %v653
        %v756 = vsel %vm750, %v747, %v655
        %v758 = vsel %vm750, %v749, %v657
        %vm759 = vcmask 162816
        %v761 = vsel %vm759, %v752, %v671
        %v763 = vsel %vm759, %v754, %v673
        %v765 = vsel %vm759, %v756, %v675
        %v767 = vsel %vm759, %v758, %v677
        %vm768 = vcmask 195584
        %v770 = vsel %vm768, %v761, %v685
        %v772 = vsel %vm768, %v763, %v687
        %v774 = vsel %vm768, %v765, %v689
        %v776 = vsel %vm768, %v767, %v691
        %vm777 = vcmask 228352
        %v779 = vsel %vm777, %v770, %v699
        %v781 = vsel %vm777, %v772, %v701
        %v783 = vsel %vm777, %v774, %v703
        %v785 = vsel %vm777, %v776, %v705
        %vm786 = vcmask 261120
        %v788 = vsel %vm786, %v779, %v712
        %v790 = vsel %vm786, %v781, %v714
        %v792 = vsel %vm786, %v783, %v716
        %v794 = vsel %vm786, %v785, %v718
        %v800 = vunpack.c.l.b16 %v288
        %v801 = vunpack.c.l.b16 %v289
        %v802 = vunpack.c.l.b16 %v290
        %v803 = vunpack.c.l.b16 %v291
        %v804 = vunpack.c.l.b16 %v292
        %v805 = vpack.c.b16 %v801, %v800
        %v806 = vpack.c.b16 %v803, %v802
        %v807 = vpack.c.b16 %v804, %v804
        %vm810 = vcmask 293888
        %v811 = vsel %vm810, %v788, 0
        %v813 = vsel %vm810, %v790, 0
        %v815 = vsel %vm810, %v792, 0
        %v817 = vsel %vm810, %v794, 0
        %vm819 = vcmask 1041408
        %v821 = vsel %vm819, %v807, 0
        %823 = vmatprep.subr.bf16.mxu0 0
        %824 = vmatpush1.bf16.msra.mxu0 %v805
        %825 = vmatprep.subr.bf16.mxu0 0
        %826 = vmatpush1.bf16.msra.mxu0 %v806
        %827 = vmatprep.subr.bf16.mxu0 0
        %828 = vmatpush1.bf16.msra.mxu0 %v821
        %829 = vmatprep.subr.bf16.mxu0 0
        %830 = vmatpush1.bf16.msra.mxu0 0
        %831 = vmatprep.subr.bf16.mxu0 0
        %832 = vmatpush1.bf16.msra.mxu0 0
        %833 = vmatprep.subr.bf16.mxu0 0
        %834 = vmatpush1.bf16.msra.mxu0 0
        %835 = vmatprep.subr.bf16.mxu0 0
        %836 = vmatpush1.bf16.msra.mxu0 0
        %837 = vmatprep.subr.bf16.mxu0 0
        %838 = vmatpush1.bf16.msra.mxu0 0
        %839 = vmatprep.subr.bf16.mxu0 0
        %840 = vmatpush1.bf16.msra.mxu0 0
        %841 = vmatprep.subr.bf16.mxu0 0
        %842 = vmatpush1.bf16.msra.mxu0 0
        %843 = vmatprep.subr.bf16.mxu0 0
        %844 = vmatpush1.bf16.msra.mxu0 0
        %845 = vmatprep.subr.bf16.mxu0 0
        %846 = vmatpush1.bf16.msra.mxu0 0
        %847 = vmatprep.subr.bf16.mxu0 0
        %848 = vmatpush1.bf16.msra.mxu0 0
        %849 = vmatprep.subr.bf16.mxu0 0
        %850 = vmatpush1.bf16.msra.mxu0 0
        %851 = vmatprep.subr.bf16.mxu0 0
        %852 = vmatpush1.bf16.msra.mxu0 0
        %853 = vmatprep.subr.bf16.mxu0 0
        %854 = vmatpush1.bf16.msra.mxu0 0
        %855 = vmatprep.mubr.bf16.mxu0 0
        %856 = vmatmul.mubr.bf16.gmra.mrb[0].mxu0 %v811
        %v857 = vpop.f32.mrb[0].mxu0
        %v858 = vadd.f32 0.0, %v857
        %v859 = vpop.f32.mrb[0].mxu0
        %v860 = vpop.f32.mrb[0].mxu0
        %v861 = vadd.f32 0.0, %v860
        %v862 = vpop.f32.mrb[0].mxu0
        %863 = vmatprep.mubr.bf16.mxu0 0
        %864 = vmatmul.mubr.bf16.gmra.mrb[0].mxu0 %v813
        %v865 = vpop.f32.mrb[0].mxu0
        %v866 = vadd.f32 0.0, %v865
        %v867 = vpop.f32.mrb[0].mxu0
        %v868 = vpop.f32.mrb[0].mxu0
        %v869 = vadd.f32 0.0, %v868
        %v870 = vpop.f32.mrb[0].mxu0
        %871 = vmatprep.mubr.bf16.mxu0 0
        %872 = vmatmul.mubr.bf16.gmra.mrb[0].mxu0 %v815
        %v873 = vpop.f32.mrb[0].mxu0
        %v874 = vadd.f32 0.0, %v873
        %v875 = vpop.f32.mrb[0].mxu0
        %v876 = vpop.f32.mrb[0].mxu0
        %v877 = vadd.f32 0.0, %v876
        %v878 = vpop.f32.mrb[0].mxu0
        %879 = vmatprep.mubr.bf16.mxu0 0
        %880 = vmatmul.mubr.bf16.gmra.mrb[0].mxu0 %v817
        %v881 = vpop.f32.mrb[0].mxu0
        %v882 = vadd.f32 0.0, %v881
        %v883 = vpop.f32.mrb[0].mxu0
        %v884 = vpop.f32.mrb[0].mxu0
        %v885 = vadd.f32 0.0, %v884
        %v886 = vpop.f32.mrb[0].mxu0
        %887 = vdwg.mxu0
        %v888 = vpack.c.bf16 %v861, %v858
        %v889 = vpack.c.bf16 %v869, %v866
        %v890 = vpack.c.bf16 %v877, %v874
        %v891 = vpack.c.bf16 %v885, %v882
        %v896 = vunpack.c.l.b16 %v888
        %v897 = vunpack.c.h.b16 %v888
        %v898 = vunpack.c.l.b16 %v889
        %v899 = vunpack.c.h.b16 %v889
        %v900 = vunpack.c.l.b16 %v890
        %v901 = vunpack.c.h.b16 %v890
        %v902 = vunpack.c.l.b16 %v891
        %v903 = vunpack.c.h.b16 %v891
        %v904 = vpack.c.b16 %v896, %v896
        %v905 = vpack.c.b16 %v897, %v897
        %v906 = vpack.c.b16 %v898, %v898
        %v907 = vpack.c.b16 %v899, %v899
        %v908 = vpack.c.b16 %v900, %v900
        %v909 = vpack.c.b16 %v901, %v901
        %v910 = vpack.c.b16 %v902, %v902
        %v911 = vpack.c.b16 %v903, %v903
        %vm920 = vcmask 60416
        %921 = vst.msk [vmem:[%s207] sm:$0xf] %vm920, %v904
        %922 = vst.msk [vmem:[%s207 + $0x4] sm:$0xf] %vm920, %v905
        %923 = vst.msk [vmem:[%s207 + $0x8] sm:$0xf] %vm920, %v906
        %924 = vst.msk [vmem:[%s207 + $0xc] sm:$0xf] %vm920, %v907
        %925 = vst.msk [vmem:[%s207 + $0x10] sm:$0xf] %vm920, %v908
        %926 = vst.msk [vmem:[%s207 + $0x14] sm:$0xf] %vm920, %v909
        %927 = vst.msk [vmem:[%s207 + $0x18] sm:$0xf] %vm920, %v910
        %928 = vst.msk [vmem:[%s207 + $0x1c] sm:$0xf] %vm920, %v911
        %v929 = vunpack.c.l.bf16 %v888
        %v930 = vunpack.c.h.bf16 %v888
        %v931 = vunpack.c.l.bf16 %v889
        %v932 = vunpack.c.h.bf16 %v889
        %v933 = vunpack.c.l.bf16 %v890
        %v934 = vunpack.c.h.bf16 %v890
        %v935 = vunpack.c.l.bf16 %v891
        %v936 = vunpack.c.h.bf16 %v891
        %v937 = vsel %vm732, %v929, 0.0
        %v938 = vsel %vm732, %v930, 0.0
        %v939 = vadd.f32 %v937, %v938
        %v940 = vsel %vm732, %v931, 0.0
        %v941 = vadd.f32 %v939, %v940
        %v942 = vsel %vm732, %v932, 0.0
        %v943 = vadd.f32 %v941, %v942
        %v944 = vsel %vm732, %v933, 0.0
        %v945 = vadd.f32 %v943, %v944
        %v946 = vsel %vm732, %v934, 0.0
        %v947 = vadd.f32 %v945, %v946
        %v948 = vsel %vm732, %v935, 0.0
        %v949 = vadd.f32 %v947, %v948
        %v950 = vsel %vm732, %v936, 0.0
        %v951 = vadd.f32 %v949, %v950
        %v952 = vrot.slane %v951, 4
        %v953 = vadd.f32 %v951, %v952
        %v954 = vrot.slane %v953, 2
        %v955 = vadd.f32 %v953, %v954
        %v956 = vrot.slane %v955, 1
        %v957 = vadd.f32 %v955, %v956
        %v958 = vadd.f32 %v957, 0.0
        %v959 = vmul.f32 %v929, %v929
        %v960 = vmul.f32 %v930, %v930
        %v961 = vmul.f32 %v931, %v931
        %v962 = vmul.f32 %v932, %v932
        %v963 = vmul.f32 %v933, %v933
        %v964 = vmul.f32 %v934, %v934
        %v965 = vmul.f32 %v935, %v935
        %v966 = vmul.f32 %v936, %v936
        %v967 = vsel %vm732, %v959, 0.0
        %v968 = vsel %vm732, %v960, 0.0
        %v969 = vadd.f32 %v967, %v968
        %v970 = vsel %vm732, %v961, 0.0
        %v971 = vadd.f32 %v969, %v970
        %v972 = vsel %vm732, %v962, 0.0
        %v973 = vadd.f32 %v971, %v972
        %v974 = vsel %vm732, %v963, 0.0
        %v975 = vadd.f32 %v973, %v974
        %v976 = vsel %vm732, %v964, 0.0
        %v977 = vadd.f32 %v975, %v976
        %v978 = vsel %vm732, %v965, 0.0
        %v979 = vadd.f32 %v977, %v978
        %v980 = vsel %vm732, %v966, 0.0
        %v981 = vadd.f32 %v979, %v980
        %v982 = vrot.slane %v981, 4
        %v983 = vadd.f32 %v981, %v982
        %v984 = vrot.slane %v983, 2
        %v985 = vadd.f32 %v983, %v984
        %v986 = vrot.slane %v985, 1
        %v987 = vadd.f32 %v985, %v986
        %v988 = vadd.f32 %v987, 0.0
        %v990 = vshrl.u32 %v234, 16
        %v992 = vrot.slane %v990, 4
        %v993 = vshll.u32 %v234, 16
        %v995 = vrot.slane %v993, 5
        %v996 = vor.u32 %v992, %v995
        %v997 = vrot.slane %v996, 4
        %v999 = vshll.u32 %v235, 16
        %v1001 = vrot.slane %v999, 5
        %v1002 = vsel %vm295, %v997, %v1001
        %v1004 = vshrl.u32 %v236, 16
        %v1006 = vrot.slane %v1004, 4
        %v1007 = vshll.u32 %v236, 16
        %v1009 = vrot.slane %v1007, 5
        %v1010 = vor.u32 %v1006, %v1009
        %v1011 = vrot.slane %v1010, 4
        %v1013 = vshll.u32 %v237, 16
        %v1015 = vrot.slane %v1013, 5
        %v1016 = vsel %vm295, %v1011, %v1015
        %v1018 = vshrl.u32 %v238, 16
        %v1020 = vrot.slane %v1018, 4
        %v1021 = vshll.u32 %v238, 16
        %v1023 = vrot.slane %v1021, 5
        %v1024 = vor.u32 %v1020, %v1023
        %v1025 = vrot.slane %v1024, 4
        %v1027 = vshll.u32 %v239, 16
        %v1029 = vrot.slane %v1027, 5
        %v1030 = vsel %vm295, %v1025, %v1029
        %v1032 = vshrl.u32 %v240, 16
        %v1034 = vrot.slane %v1032, 4
        %v1035 = vshll.u32 %v240, 16
        %v1037 = vrot.slane %v1035, 5
        %v1038 = vor.u32 %v1034, %v1037
        %v1039 = vrot.slane %v1038, 4
        %v1041 = vshll.u32 %v241, 16
        %v1043 = vrot.slane %v1041, 5
        %v1044 = vsel %vm295, %v1039, %v1043
        %v1046 = vshrl.u32 %v242, 16
        %v1048 = vrot.slane %v1046, 4
        %v1049 = vshll.u32 %v242, 16
        %v1051 = vrot.slane %v1049, 5
        %v1052 = vor.u32 %v1048, %v1051
        %v1053 = vrot.slane %v1052, 4
        %v1055 = vshll.u32 %v243, 16
        %v1057 = vrot.slane %v1055, 5
        %v1058 = vsel %vm295, %v1053, %v1057
        %v1060 = vshrl.u32 %v244, 16
        %v1062 = vrot.slane %v1060, 4
        %v1063 = vshll.u32 %v244, 16
        %v1065 = vrot.slane %v1063, 5
        %v1066 = vor.u32 %v1062, %v1065
        %v1067 = vrot.slane %v1066, 4
        %v1069 = vshll.u32 %v245, 16
        %v1071 = vrot.slane %v1069, 5
        %v1072 = vsel %vm295, %v1067, %v1071
        %v1074 = vshrl.u32 %v246, 16
        %v1076 = vrot.slane %v1074, 4
        %v1077 = vshll.u32 %v246, 16
        %v1079 = vrot.slane %v1077, 5
        %v1080 = vor.u32 %v1076, %v1079
        %v1081 = vrot.slane %v1080, 4
        %v1083 = vshll.u32 %v247, 16
        %v1085 = vrot.slane %v1083, 5
        %v1086 = vsel %vm295, %v1081, %v1085
        %v1088 = vshrl.u32 %v248, 16
        %v1090 = vrot.slane %v1088, 4
        %v1091 = vshll.u32 %v248, 16
        %v1093 = vrot.slane %v1091, 5
        %v1094 = vor.u32 %v1090, %v1093
        %v1095 = vrot.slane %v1094, 4
        %v1097 = vshll.u32 %v249, 16
        %v1099 = vrot.slane %v1097, 5
        %v1100 = vsel %vm295, %v1095, %v1099
        %v1102 = vshrl.u32 %v270, 16
        %v1104 = vrot.slane %v1102, 4
        %v1105 = vshll.u32 %v270, 16
        %v1107 = vrot.slane %v1105, 5
        %v1108 = vor.u32 %v1104, %v1107
        %v1109 = vrot.slane %v1108, 4
        %v1111 = vshll.u32 %v271, 16
        %v1113 = vrot.slane %v1111, 5
        %v1114 = vsel %vm295, %v1109, %v1113
        %v1116 = vshrl.u32 %v272, 16
        %v1118 = vrot.slane %v1116, 4
        %v1119 = vshll.u32 %v272, 16
        %v1121 = vrot.slane %v1119, 5
        %v1122 = vor.u32 %v1118, %v1121
        %v1123 = vrot.slane %v1122, 4
        %v1125 = vshll.u32 %v273, 16
        %v1127 = vrot.slane %v1125, 5
        %v1128 = vsel %vm295, %v1123, %v1127
        %v1130 = vshrl.u32 %v274, 16
        %v1132 = vrot.slane %v1130, 4
        %v1133 = vshll.u32 %v274, 16
        %v1135 = vrot.slane %v1133, 5
        %v1136 = vor.u32 %v1132, %v1135
        %v1137 = vrot.slane %v1136, 4
        %v1139 = vshll.u32 %v275, 16
        %v1141 = vrot.slane %v1139, 5
        %v1142 = vsel %vm295, %v1137, %v1141
        %v1144 = vshrl.u32 %v276, 16
        %v1146 = vrot.slane %v1144, 4
        %v1147 = vshll.u32 %v276, 16
        %v1149 = vrot.slane %v1147, 5
        %v1150 = vor.u32 %v1146, %v1149
        %v1151 = vrot.slane %v1150, 4
        %v1153 = vshll.u32 %v277, 16
        %v1155 = vrot.slane %v1153, 5
        %v1156 = vsel %vm295, %v1151, %v1155
        %v1158 = vshrl.u32 %v278, 16
        %v1160 = vrot.slane %v1158, 4
        %v1161 = vshll.u32 %v278, 16
        %v1163 = vrot.slane %v1161, 5
        %v1164 = vor.u32 %v1160, %v1163
        %v1165 = vrot.slane %v1164, 4
        %v1167 = vshll.u32 %v279, 16
        %v1169 = vrot.slane %v1167, 5
        %v1170 = vsel %vm295, %v1165, %v1169
        %v1172 = vshrl.u32 %v280, 16
        %v1174 = vrot.slane %v1172, 4
        %v1175 = vshll.u32 %v280, 16
        %v1177 = vrot.slane %v1175, 5
        %v1178 = vor.u32 %v1174, %v1177
        %v1179 = vrot.slane %v1178, 4
        %v1181 = vshll.u32 %v281, 16
        %v1183 = vrot.slane %v1181, 5
        %v1184 = vsel %vm295, %v1179, %v1183
        %v1186 = vshrl.u32 %v282, 16
        %v1188 = vrot.slane %v1186, 4
        %v1189 = vshll.u32 %v282, 16
        %v1191 = vrot.slane %v1189, 5
        %v1192 = vor.u32 %v1188, %v1191
        %v1193 = vrot.slane %v1192, 4
        %v1195 = vshll.u32 %v283, 16
        %v1197 = vrot.slane %v1195, 5
        %v1198 = vsel %vm295, %v1193, %v1197
        %v1200 = vshrl.u32 %v284, 16
        %v1202 = vrot.slane %v1200, 4
        %v1203 = vshll.u32 %v284, 16
        %v1205 = vrot.slane %v1203, 5
        %v1206 = vor.u32 %v1202, %v1205
        %v1207 = vrot.slane %v1206, 4
        %v1209 = vshll.u32 %v285, 16
        %v1211 = vrot.slane %v1209, 5
        %v1212 = vsel %vm295, %v1207, %v1211
        %v1214 = vshrl.u32 %v250, 16
        %v1216 = vrot.slane %v1214, 4
        %v1217 = vshll.u32 %v250, 16
        %v1219 = vrot.slane %v1217, 5
        %v1220 = vor.u32 %v1216, %v1219
        %v1221 = vrot.slane %v1220, 4
        %v1223 = vshll.u32 %v251, 16
        %v1225 = vrot.slane %v1223, 5
        %v1226 = vsel %vm295, %v1221, %v1225
        %1227 = vrot.lane.b32.xlu0 %v590, 4
        %v1228 = vpop.permute.xlu0 %1227
        %1229 = vrot.lane.b32.xlu0 %v591, 4
        %v1230 = vpop.permute.xlu0 %1229
        %1231 = vrot.lane.b32.xlu0 %v592, 4
        %v1232 = vpop.permute.xlu0 %1231
        %1233 = vrot.lane.b32.xlu0 %v593, 4
        %v1234 = vpop.permute.xlu0 %1233
        %v1235 = vunpack.c.l.b16 %v1002
        %v1236 = vunpack.c.l.b16 %v1016
        %v1237 = vunpack.c.l.b16 %v1030
        %v1238 = vunpack.c.l.b16 %v1044
        %v1239 = vunpack.c.l.b16 %v1058
        %v1240 = vunpack.c.l.b16 %v1072
        %v1241 = vunpack.c.l.b16 %v1086
        %v1242 = vunpack.c.l.b16 %v1100
        %v1243 = vpack.c.b16 %v1236, %v1235
        %v1244 = vpack.c.b16 %v1238, %v1237
        %v1245 = vpack.c.b16 %v1240, %v1239
        %v1246 = vpack.c.b16 %v1242, %v1241
        %1247 = vrot.lane.b32.xlu0 %v1243, 8
        %v1248 = vpop.permute.xlu0 %1247
        %1249 = vrot.lane.b32.xlu0 %v1244, 8
        %v1250 = vpop.permute.xlu0 %1249
        %1251 = vrot.lane.b32.xlu0 %v1245, 8
        %v1252 = vpop.permute.xlu0 %1251
        %1253 = vrot.lane.b32.xlu0 %v1246, 8
        %v1254 = vpop.permute.xlu0 %1253
        %1255 = vrot.lane.b32.xlu0 %v646, 12
        %v1256 = vpop.permute.xlu0 %1255
        %1257 = vrot.lane.b32.xlu0 %v647, 12
        %v1258 = vpop.permute.xlu0 %1257
        %1259 = vrot.lane.b32.xlu0 %v648, 12
        %v1260 = vpop.permute.xlu0 %1259
        %1261 = vrot.lane.b32.xlu0 %v649, 12
        %v1262 = vpop.permute.xlu0 %1261
        %1263 = vrot.lane.b32.xlu0 %v666, 16
        %v1264 = vpop.permute.xlu0 %1263
        %1265 = vrot.lane.b32.xlu0 %v667, 16
        %v1266 = vpop.permute.xlu0 %1265
        %1267 = vrot.lane.b32.xlu0 %v668, 16
        %v1268 = vpop.permute.xlu0 %1267
        %1269 = vrot.lane.b32.xlu0 %v669, 16
        %v1270 = vpop.permute.xlu0 %1269
        %v1271 = vunpack.c.l.b16 %v1114
        %v1272 = vunpack.c.l.b16 %v1128
        %v1273 = vunpack.c.l.b16 %v1142
        %v1274 = vunpack.c.l.b16 %v1156
        %v1275 = vunpack.c.l.b16 %v1170
        %v1276 = vunpack.c.l.b16 %v1184
        %v1277 = vunpack.c.l.b16 %v1198
        %v1278 = vunpack.c.l.b16 %v1212
        %v1279 = vpack.c.b16 %v1272, %v1271
        %v1280 = vpack.c.b16 %v1274, %v1273
        %v1281 = vpack.c.b16 %v1276, %v1275
        %v1282 = vpack.c.b16 %v1278, %v1277
        %1283 = vrot.lane.b32.xlu0 %v1279, 20
        %v1284 = vpop.permute.xlu0 %1283
        %1285 = vrot.lane.b32.xlu0 %v1280, 20
        %v1286 = vpop.permute.xlu0 %1285
        %1287 = vrot.lane.b32.xlu0 %v1281, 20
        %v1288 = vpop.permute.xlu0 %1287
        %1289 = vrot.lane.b32.xlu0 %v1282, 20
        %v1290 = vpop.permute.xlu0 %1289
        %1291 = vrot.lane.b32.xlu0 %v694, 24
        %v1292 = vpop.permute.xlu0 %1291
        %1293 = vrot.lane.b32.xlu0 %v695, 24
        %v1294 = vpop.permute.xlu0 %1293
        %1295 = vrot.lane.b32.xlu0 %v696, 24
        %v1296 = vpop.permute.xlu0 %1295
        %1297 = vrot.lane.b32.xlu0 %v697, 24
        %v1298 = vpop.permute.xlu0 %1297
        %1299 = vrot.lane.b32.xlu0 %v707, 28
        %v1300 = vpop.permute.xlu0 %1299
        %1301 = vrot.lane.b32.xlu0 %v708, 28
        %v1302 = vpop.permute.xlu0 %1301
        %1303 = vrot.lane.b32.xlu0 %v709, 28
        %v1304 = vpop.permute.xlu0 %1303
        %1305 = vrot.lane.b32.xlu0 %v710, 28
        %v1306 = vpop.permute.xlu0 %1305
        %v1307 = vunpack.c.l.b16 %v1226
        %v1308 = vpack.c.b16 %v1237, %v1236
        %v1309 = vpack.c.b16 %v1239, %v1238
        %v1310 = vpack.c.b16 %v1241, %v1240
        %v1311 = vpack.c.b16 %v1307, %v1242
        %1312 = vrot.lane.b32.xlu0 %v1308, 32
        %v1313 = vpop.permute.xlu0 %1312
        %1314 = vrot.lane.b32.xlu0 %v1309, 32
        %v1315 = vpop.permute.xlu0 %1314
        %1316 = vrot.lane.b32.xlu0 %v1310, 32
        %v1317 = vpop.permute.xlu0 %1316
        %1318 = vrot.lane.b32.xlu0 %v1311, 32
        %v1319 = vpop.permute.xlu0 %1318
        %v1322 = vsel %vm719, %v570, %v1228
        %v1325 = vsel %vm719, %v571, %v1230
        %v1328 = vsel %vm719, %v572, %v1232
        %v1331 = vsel %vm719, %v573, %v1234
        %v1333 = vsel %vm732, %v1322, %v1248
        %v1335 = vsel %vm732, %v1325, %v1250
        %v1337 = vsel %vm732, %v1328, %v1252
        %v1339 = vsel %vm732, %v1331, %v1254
        %v1341 = vsel %vm741, %v1333, %v1256
        %v1343 = vsel %vm741, %v1335, %v1258
        %v1345 = vsel %vm741, %v1337, %v1260
        %v1347 = vsel %vm741, %v1339, %v1262
        %v1349 = vsel %vm750, %v1341, %v1264
        %v1351 = vsel %vm750, %v1343, %v1266
        %v1353 = vsel %vm750, %v1345, %v1268
        %v1355 = vsel %vm750, %v1347, %v1270
        %v1357 = vsel %vm759, %v1349, %v1284
        %v1359 = vsel %vm759, %v1351, %v1286
        %v1361 = vsel %vm759, %v1353, %v1288
        %v1363 = vsel %vm759, %v1355, %v1290
        %v1365 = vsel %vm768, %v1357, %v1292
        %v1367 = vsel %vm768, %v1359, %v1294
        %v1369 = vsel %vm768, %v1361, %v1296
        %v1371 = vsel %vm768, %v1363, %v1298
        %v1373 = vsel %vm777, %v1365, %v1300
        %v1375 = vsel %vm777, %v1367, %v1302
        %v1377 = vsel %vm777, %v1369, %v1304
        %v1379 = vsel %vm777, %v1371, %v1306
        %v1381 = vsel %vm786, %v1373, %v1313
        %v1383 = vsel %vm786, %v1375, %v1315
        %v1385 = vsel %vm786, %v1377, %v1317
        %v1387 = vsel %vm786, %v1379, %v1319
        %v1388 = vsel %vm810, %v1381, 0
        %v1390 = vsel %vm810, %v1383, 0
        %v1392 = vsel %vm810, %v1385, 0
        %v1394 = vsel %vm810, %v1387, 0
        %1396 = vmatprep.subr.bf16.mxu0 0
        %1397 = vmatpush1.bf16.msra.mxu0 %v805
        %1398 = vmatprep.subr.bf16.mxu0 0
        %1399 = vmatpush1.bf16.msra.mxu0 %v806
        %1400 = vmatprep.subr.bf16.mxu0 0
        %1401 = vmatpush1.bf16.msra.mxu0 %v821
        %1402 = vmatprep.subr.bf16.mxu0 0
        %1403 = vmatpush1.bf16.msra.mxu0 0
        %1404 = vmatprep.subr.bf16.mxu0 0
        %1405 = vmatpush1.bf16.msra.mxu0 0
        %1406 = vmatprep.subr.bf16.mxu0 0
        %1407 = vmatpush1.bf16.msra.mxu0 0
        %1408 = vmatprep.subr.bf16.mxu0 0
        %1409 = vmatpush1.bf16.msra.mxu0 0
        %1410 = vmatprep.subr.bf16.mxu0 0
        %1411 = vmatpush1.bf16.msra.mxu0 0
        %1412 = vmatprep.subr.bf16.mxu0 0
        %1413 = vmatpush1.bf16.msra.mxu0 0
        %1414 = vmatprep.subr.bf16.mxu0 0
        %1415 = vmatpush1.bf16.msra.mxu0 0
        %1416 = vmatprep.subr.bf16.mxu0 0
        %1417 = vmatpush1.bf16.msra.mxu0 0
        %1418 = vmatprep.subr.bf16.mxu0 0
        %1419 = vmatpush1.bf16.msra.mxu0 0
        %1420 = vmatprep.subr.bf16.mxu0 0
        %1421 = vmatpush1.bf16.msra.mxu0 0
        %1422 = vmatprep.subr.bf16.mxu0 0
        %1423 = vmatpush1.bf16.msra.mxu0 0
        %1424 = vmatprep.subr.bf16.mxu0 0
        %1425 = vmatpush1.bf16.msra.mxu0 0
        %1426 = vmatprep.subr.bf16.mxu0 0
        %1427 = vmatpush1.bf16.msra.mxu0 0
        %1428 = vmatprep.mubr.bf16.mxu0 0
        %1429 = vmatmul.mubr.bf16.gmra.mrb[0].mxu0 %v1388
        %v1430 = vpop.f32.mrb[0].mxu0
        %v1431 = vadd.f32 0.0, %v1430
        %v1432 = vpop.f32.mrb[0].mxu0
        %v1433 = vpop.f32.mrb[0].mxu0
        %v1434 = vadd.f32 0.0, %v1433
        %v1435 = vpop.f32.mrb[0].mxu0
        %1436 = vmatprep.mubr.bf16.mxu0 0
        %1437 = vmatmul.mubr.bf16.gmra.mrb[0].mxu0 %v1390
        %v1438 = vpop.f32.mrb[0].mxu0
        %v1439 = vadd.f32 0.0, %v1438
        %v1440 = vpop.f32.mrb[0].mxu0
        %v1441 = vpop.f32.mrb[0].mxu0
        %v1442 = vadd.f32 0.0, %v1441
        %v1443 = vpop.f32.mrb[0].mxu0
        %1444 = vmatprep.mubr.bf16.mxu0 0
        %1445 = vmatmul.mubr.bf16.gmra.mrb[0].mxu0 %v1392
        %v1446 = vpop.f32.mrb[0].mxu0
        %v1447 = vadd.f32 0.0, %v1446
        %v1448 = vpop.f32.mrb[0].mxu0
        %v1449 = vpop.f32.mrb[0].mxu0
        %v1450 = vadd.f32 0.0, %v1449
        %v1451 = vpop.f32.mrb[0].mxu0
        %1452 = vmatprep.mubr.bf16.mxu0 0
        %1453 = vmatmul.mubr.bf16.gmra.mrb[0].mxu0 %v1394
        %v1454 = vpop.f32.mrb[0].mxu0
        %v1455 = vadd.f32 0.0, %v1454
        %v1456 = vpop.f32.mrb[0].mxu0
        %v1457 = vpop.f32.mrb[0].mxu0
        %v1458 = vadd.f32 0.0, %v1457
        %v1459 = vpop.f32.mrb[0].mxu0
        %1460 = vdwg.mxu0
        %v1461 = vpack.c.bf16 %v1434, %v1431
        %v1462 = vpack.c.bf16 %v1442, %v1439
        %v1463 = vpack.c.bf16 %v1450, %v1447
        %v1464 = vpack.c.bf16 %v1458, %v1455
        %v1469 = vunpack.c.l.b16 %v1461
        %v1470 = vunpack.c.h.b16 %v1461
        %v1471 = vunpack.c.l.b16 %v1462
        %v1472 = vunpack.c.h.b16 %v1462
        %v1473 = vunpack.c.l.b16 %v1463
        %v1474 = vunpack.c.h.b16 %v1463
        %v1475 = vunpack.c.l.b16 %v1464
        %v1476 = vunpack.c.h.b16 %v1464
        %v1477 = vpack.c.b16 %v1469, %v1469
        %v1478 = vpack.c.b16 %v1470, %v1470
        %v1479 = vpack.c.b16 %v1471, %v1471
        %v1480 = vpack.c.b16 %v1472, %v1472
        %v1481 = vpack.c.b16 %v1473, %v1473
        %v1482 = vpack.c.b16 %v1474, %v1474
        %v1483 = vpack.c.b16 %v1475, %v1475
        %v1484 = vpack.c.b16 %v1476, %v1476
        %s1493 = scalar_lea.vmem %s207, 32 [#allocation7]
        %1494 = vst.msk [vmem:[%s1493] sm:$0xf] %vm920, %v1477
        %1495 = vst.msk [vmem:[%s1493 + $0x4] sm:$0xf] %vm920, %v1478
        %1496 = vst.msk [vmem:[%s1493 + $0x8] sm:$0xf] %vm920, %v1479
        %1497 = vst.msk [vmem:[%s1493 + $0xc] sm:$0xf] %vm920, %v1480
        %1498 = vst.msk [vmem:[%s1493 + $0x10] sm:$0xf] %vm920, %v1481
        %1499 = vst.msk [vmem:[%s1493 + $0x14] sm:$0xf] %vm920, %v1482
        %1500 = vst.msk [vmem:[%s1493 + $0x18] sm:$0xf] %vm920, %v1483
        %1501 = vst.msk [vmem:[%s1493 + $0x1c] sm:$0xf] %vm920, %v1484
        %v1502 = vunpack.c.l.bf16 %v1461
        %v1503 = vunpack.c.h.bf16 %v1461
        %v1504 = vunpack.c.l.bf16 %v1462
        %v1505 = vunpack.c.h.bf16 %v1462
        %v1506 = vunpack.c.l.bf16 %v1463
        %v1507 = vunpack.c.h.bf16 %v1463
        %v1508 = vunpack.c.l.bf16 %v1464
        %v1509 = vunpack.c.h.bf16 %v1464
        %v1510 = vsel %vm732, %v1502, 0.0
        %v1511 = vsel %vm732, %v1503, 0.0
        %v1512 = vadd.f32 %v1510, %v1511
        %v1513 = vsel %vm732, %v1504, 0.0
        %v1514 = vadd.f32 %v1512, %v1513
        %v1515 = vsel %vm732, %v1505, 0.0
        %v1516 = vadd.f32 %v1514, %v1515
        %v1517 = vsel %vm732, %v1506, 0.0
        %v1518 = vadd.f32 %v1516, %v1517
        %v1519 = vsel %vm732, %v1507, 0.0
        %v1520 = vadd.f32 %v1518, %v1519
        %v1521 = vsel %vm732, %v1508, 0.0
        %v1522 = vadd.f32 %v1520, %v1521
        %v1523 = vsel %vm732, %v1509, 0.0
        %v1524 = vadd.f32 %v1522, %v1523
        %v1525 = vrot.slane %v1524, 4
        %v1526 = vadd.f32 %v1524, %v1525
        %v1527 = vrot.slane %v1526, 2
        %v1528 = vadd.f32 %v1526, %v1527
        %v1529 = vrot.slane %v1528, 1
        %v1530 = vadd.f32 %v1528, %v1529
        %v1531 = vadd.f32 %v958, %v1530
        %v1532 = vmul.f32 %v1502, %v1502
        %v1533 = vmul.f32 %v1503, %v1503
        %v1534 = vmul.f32 %v1504, %v1504
        %v1535 = vmul.f32 %v1505, %v1505
        %v1536 = vmul.f32 %v1506, %v1506
        %v1537 = vmul.f32 %v1507, %v1507
        %v1538 = vmul.f32 %v1508, %v1508
        %v1539 = vmul.f32 %v1509, %v1509
        %v1540 = vsel %vm732, %v1532, 0.0
        %v1541 = vsel %vm732, %v1533, 0.0
        %v1542 = vadd.f32 %v1540, %v1541
        %v1543 = vsel %vm732, %v1534, 0.0
        %v1544 = vadd.f32 %v1542, %v1543
        %v1545 = vsel %vm732, %v1535, 0.0
        %v1546 = vadd.f32 %v1544, %v1545
        %v1547 = vsel %vm732, %v1536, 0.0
        %v1548 = vadd.f32 %v1546, %v1547
        %v1549 = vsel %vm732, %v1537, 0.0
        %v1550 = vadd.f32 %v1548, %v1549
        %v1551 = vsel %vm732, %v1538, 0.0
        %v1552 = vadd.f32 %v1550, %v1551
        %v1553 = vsel %vm732, %v1539, 0.0
        %v1554 = vadd.f32 %v1552, %v1553
        %v1555 = vrot.slane %v1554, 4
        %v1556 = vadd.f32 %v1554, %v1555
        %v1557 = vrot.slane %v1556, 2
        %v1558 = vadd.f32 %v1556, %v1557
        %v1559 = vrot.slane %v1558, 1
        %v1560 = vadd.f32 %v1558, %v1559
        %v1561 = vadd.f32 %v988, %v1560
        %v1563 = vshrl.u32 %v268, 16
        %v1565 = vrot.slane %v1563, 4
        %v1566 = vshll.u32 %v268, 16
        %v1568 = vrot.slane %v1566, 5
        %v1569 = vor.u32 %v1565, %v1568
        %v1570 = vrot.slane %v1569, 4
        %v1572 = vshll.u32 %v269, 16
        %v1574 = vrot.slane %v1572, 5
        %v1575 = vsel %vm295, %v1570, %v1574
        %1576 = vrot.lane.b32.xlu0 %v646, 4
        %v1577 = vpop.permute.xlu0 %1576
        %1578 = vrot.lane.b32.xlu0 %v647, 4
        %v1579 = vpop.permute.xlu0 %1578
        %1580 = vrot.lane.b32.xlu0 %v648, 4
        %v1581 = vpop.permute.xlu0 %1580
        %1582 = vrot.lane.b32.xlu0 %v649, 4
        %v1583 = vpop.permute.xlu0 %1582
        %1584 = vrot.lane.b32.xlu0 %v666, 8
        %v1585 = vpop.permute.xlu0 %1584
        %1586 = vrot.lane.b32.xlu0 %v667, 8
        %v1587 = vpop.permute.xlu0 %1586
        %1588 = vrot.lane.b32.xlu0 %v668, 8
        %v1589 = vpop.permute.xlu0 %1588
        %1590 = vrot.lane.b32.xlu0 %v669, 8
        %v1591 = vpop.permute.xlu0 %1590
        %1592 = vrot.lane.b32.xlu0 %v680, 12
        %v1593 = vpop.permute.xlu0 %1592
        %1594 = vrot.lane.b32.xlu0 %v681, 12
        %v1595 = vpop.permute.xlu0 %1594
        %1596 = vrot.lane.b32.xlu0 %v682, 12
        %v1597 = vpop.permute.xlu0 %1596
        %1598 = vrot.lane.b32.xlu0 %v683, 12
        %v1599 = vpop.permute.xlu0 %1598
        %1600 = vrot.lane.b32.xlu0 %v694, 16
        %v1601 = vpop.permute.xlu0 %1600
        %1602 = vrot.lane.b32.xlu0 %v695, 16
        %v1603 = vpop.permute.xlu0 %1602
        %1604 = vrot.lane.b32.xlu0 %v696, 16
        %v1605 = vpop.permute.xlu0 %1604
        %1606 = vrot.lane.b32.xlu0 %v697, 16
        %v1607 = vpop.permute.xlu0 %1606
        %1608 = vrot.lane.b32.xlu0 %v707, 20
        %v1609 = vpop.permute.xlu0 %1608
        %1610 = vrot.lane.b32.xlu0 %v708, 20
        %v1611 = vpop.permute.xlu0 %1610
        %1612 = vrot.lane.b32.xlu0 %v709, 20
        %v1613 = vpop.permute.xlu0 %1612
        %1614 = vrot.lane.b32.xlu0 %v710, 20
        %v1615 = vpop.permute.xlu0 %1614
        %v1617 = vunpack.c.l.b16 %v268
        %v1618 = vpack.c.b16 %v612, %v611
        %v1619 = vpack.c.b16 %v614, %v613
        %v1620 = vpack.c.b16 %v616, %v615
        %v1621 = vpack.c.b16 %v1617, %v617
        %1622 = vrot.lane.b32.xlu0 %v1618, 24
        %v1623 = vpop.permute.xlu0 %1622
        %1624 = vrot.lane.b32.xlu0 %v1619, 24
        %v1625 = vpop.permute.xlu0 %1624
        %1626 = vrot.lane.b32.xlu0 %v1620, 24
        %v1627 = vpop.permute.xlu0 %1626
        %1628 = vrot.lane.b32.xlu0 %v1621, 24
        %v1629 = vpop.permute.xlu0 %1628
        %v1631 = vunpack.c.l.b16 %v286
        %v1632 = vpack.c.b16 %v640, %v639
        %v1633 = vpack.c.b16 %v642, %v641
        %v1634 = vpack.c.b16 %v644, %v643
        %v1635 = vpack.c.b16 %v1631, %v645
        %1636 = vrot.lane.b32.xlu0 %v1632, 28
        %v1637 = vpop.permute.xlu0 %1636
        %1638 = vrot.lane.b32.xlu0 %v1633, 28
        %v1639 = vpop.permute.xlu0 %1638
        %1640 = vrot.lane.b32.xlu0 %v1634, 28
        %v1641 = vpop.permute.xlu0 %1640
        %1642 = vrot.lane.b32.xlu0 %v1635, 28
        %v1643 = vpop.permute.xlu0 %1642
        %v1644 = vunpack.c.l.b16 %v1575
        %v1645 = vpack.c.b16 %v660, %v659
        %v1646 = vpack.c.b16 %v662, %v661
        %v1647 = vpack.c.b16 %v664, %v663
        %v1648 = vpack.c.b16 %v1644, %v665
        %1649 = vrot.lane.b32.xlu0 %v1645, 32
        %v1650 = vpop.permute.xlu0 %1649
        %1651 = vrot.lane.b32.xlu0 %v1646, 32
        %v1652 = vpop.permute.xlu0 %1651
        %1653 = vrot.lane.b32.xlu0 %v1647, 32
        %v1654 = vpop.permute.xlu0 %1653
        %1655 = vrot.lane.b32.xlu0 %v1648, 32
        %v1656 = vpop.permute.xlu0 %1655
        %v1659 = vsel %vm719, %v618, %v1577
        %v1662 = vsel %vm719, %v619, %v1579
        %v1665 = vsel %vm719, %v620, %v1581
        %v1668 = vsel %vm719, %v621, %v1583
        %v1670 = vsel %vm732, %v1659, %v1585
        %v1672 = vsel %vm732, %v1662, %v1587
        %v1674 = vsel %vm732, %v1665, %v1589
        %v1676 = vsel %vm732, %v1668, %v1591
        %v1678 = vsel %vm741, %v1670, %v1593
        %v1680 = vsel %vm741, %v1672, %v1595
        %v1682 = vsel %vm741, %v1674, %v1597
        %v1684 = vsel %vm741, %v1676, %v1599
        %v1686 = vsel %vm750, %v1678, %v1601
        %v1688 = vsel %vm750, %v1680, %v1603
        %v1690 = vsel %vm750, %v1682, %v1605
        %v1692 = vsel %vm750, %v1684, %v1607
        %v1694 = vsel %vm759, %v1686, %v1609
        %v1696 = vsel %vm759, %v1688, %v1611
        %v1698 = vsel %vm759, %v1690, %v1613
        %v1700 = vsel %vm759, %v1692, %v1615
        %v1702 = vsel %vm768, %v1694, %v1623
        %v1704 = vsel %vm768, %v1696, %v1625
        %v1706 = vsel %vm768, %v1698, %v1627
        %v1708 = vsel %vm768, %v1700, %v1629
        %v1710 = vsel %vm777, %v1702, %v1637
        %v1712 = vsel %vm777, %v1704, %v1639
        %v1714 = vsel %vm777, %v1706, %v1641
        %v1716 = vsel %vm777, %v1708, %v1643
        %v1718 = vsel %vm786, %v1710, %v1650
        %v1720 = vsel %vm786, %v1712, %v1652
        %v1722 = vsel %vm786, %v1714, %v1654
        %v1724 = vsel %vm786, %v1716, %v1656
        %v1725 = vsel %vm810, %v1718, 0
        %v1727 = vsel %vm810, %v1720, 0
        %v1729 = vsel %vm810, %v1722, 0
        %v1731 = vsel %vm810, %v1724, 0
        %1733 = vmatprep.subr.bf16.mxu0 0
        %1734 = vmatpush1.bf16.msra.mxu0 %v805
        %1735 = vmatprep.subr.bf16.mxu0 0
        %1736 = vmatpush1.bf16.msra.mxu0 %v806
        %1737 = vmatprep.subr.bf16.mxu0 0
        %1738 = vmatpush1.bf16.msra.mxu0 %v821
        %1739 = vmatprep.subr.bf16.mxu0 0
        %1740 = vmatpush1.bf16.msra.mxu0 0
        %1741 = vmatprep.subr.bf16.mxu0 0
        %1742 = vmatpush1.bf16.msra.mxu0 0
        %1743 = vmatprep.subr.bf16.mxu0 0
        %1744 = vmatpush1.bf16.msra.mxu0 0
        %1745 = vmatprep.subr.bf16.mxu0 0
        %1746 = vmatpush1.bf16.msra.mxu0 0
        %1747 = vmatprep.subr.bf16.mxu0 0
        %1748 = vmatpush1.bf16.msra.mxu0 0
        %1749 = vmatprep.subr.bf16.mxu0 0
        %1750 = vmatpush1.bf16.msra.mxu0 0
        %1751 = vmatprep.subr.bf16.mxu0 0
        %1752 = vmatpush1.bf16.msra.mxu0 0
        %1753 = vmatprep.subr.bf16.mxu0 0
        %1754 = vmatpush1.bf16.msra.mxu0 0
        %1755 = vmatprep.subr.bf16.mxu0 0
        %1756 = vmatpush1.bf16.msra.mxu0 0
        %1757 = vmatprep.subr.bf16.mxu0 0
        %1758 = vmatpush1.bf16.msra.mxu0 0
        %1759 = vmatprep.subr.bf16.mxu0 0
        %1760 = vmatpush1.bf16.msra.mxu0 0
        %1761 = vmatprep.subr.bf16.mxu0 0
        %1762 = vmatpush1.bf16.msra.mxu0 0
        %1763 = vmatprep.subr.bf16.mxu0 0
        %1764 = vmatpush1.bf16.msra.mxu0 0
        %1765 = vmatprep.mubr.bf16.mxu0 0
        %1766 = vmatmul.mubr.bf16.gmra.mrb[0].mxu0 %v1725
        %v1767 = vpop.f32.mrb[0].mxu0
        %v1768 = vadd.f32 0.0, %v1767
        %v1769 = vpop.f32.mrb[0].mxu0
        %v1770 = vpop.f32.mrb[0].mxu0
        %v1771 = vadd.f32 0.0, %v1770
        %v1772 = vpop.f32.mrb[0].mxu0
        %1773 = vmatprep.mubr.bf16.mxu0 0
        %1774 = vmatmul.mubr.bf16.gmra.mrb[0].mxu0 %v1727
        %v1775 = vpop.f32.mrb[0].mxu0
        %v1776 = vadd.f32 0.0, %v1775
        %v1777 = vpop.f32.mrb[0].mxu0
        %v1778 = vpop.f32.mrb[0].mxu0
        %v1779 = vadd.f32 0.0, %v1778
        %v1780 = vpop.f32.mrb[0].mxu0
        %1781 = vmatprep.mubr.bf16.mxu0 0
        %1782 = vmatmul.mubr.bf16.gmra.mrb[0].mxu0 %v1729
        %v1783 = vpop.f32.mrb[0].mxu0
        %v1784 = vadd.f32 0.0, %v1783
        %v1785 = vpop.f32.mrb[0].mxu0
        %v1786 = vpop.f32.mrb[0].mxu0
        %v1787 = vadd.f32 0.0, %v1786
        %v1788 = vpop.f32.mrb[0].mxu0
        %1789 = vmatprep.mubr.bf16.mxu0 0
        %1790 = vmatmul.mubr.bf16.gmra.mrb[0].mxu0 %v1731
        %v1791 = vpop.f32.mrb[0].mxu0
        %v1792 = vadd.f32 0.0, %v1791
        %v1793 = vpop.f32.mrb[0].mxu0
        %v1794 = vpop.f32.mrb[0].mxu0
        %v1795 = vadd.f32 0.0, %v1794
        %v1796 = vpop.f32.mrb[0].mxu0
        %1797 = vdwg.mxu0
        %v1798 = vpack.c.bf16 %v1771, %v1768
        %v1799 = vpack.c.bf16 %v1779, %v1776
        %v1800 = vpack.c.bf16 %v1787, %v1784
        %v1801 = vpack.c.bf16 %v1795, %v1792
        %v1806 = vunpack.c.l.b16 %v1798
        %v1807 = vunpack.c.h.b16 %v1798
        %v1808 = vunpack.c.l.b16 %v1799
        %v1809 = vunpack.c.h.b16 %v1799
        %v1810 = vunpack.c.l.b16 %v1800
        %v1811 = vunpack.c.h.b16 %v1800
        %v1812 = vunpack.c.l.b16 %v1801
        %v1813 = vunpack.c.h.b16 %v1801
        %v1814 = vpack.c.b16 %v1806, %v1806
        %v1815 = vpack.c.b16 %v1807, %v1807
        %v1816 = vpack.c.b16 %v1808, %v1808
        %v1817 = vpack.c.b16 %v1809, %v1809
        %v1818 = vpack.c.b16 %v1810, %v1810
        %v1819 = vpack.c.b16 %v1811, %v1811
        %v1820 = vpack.c.b16 %v1812, %v1812
        %v1821 = vpack.c.b16 %v1813, %v1813
        %s1830 = scalar_lea.vmem %s207, 64 [#allocation7]
        %1831 = vst.msk [vmem:[%s1830] sm:$0xf] %vm920, %v1814
        %1832 = vst.msk [vmem:[%s1830 + $0x4] sm:$0xf] %vm920, %v1815
        %1833 = vst.msk [vmem:[%s1830 + $0x8] sm:$0xf] %vm920, %v1816
        %1834 = vst.msk [vmem:[%s1830 + $0xc] sm:$0xf] %vm920, %v1817
        %1835 = vst.msk [vmem:[%s1830 + $0x10] sm:$0xf] %vm920, %v1818
        %1836 = vst.msk [vmem:[%s1830 + $0x14] sm:$0xf] %vm920, %v1819
        %1837 = vst.msk [vmem:[%s1830 + $0x18] sm:$0xf] %vm920, %v1820
        %1838 = vst.msk [vmem:[%s1830 + $0x1c] sm:$0xf] %vm920, %v1821
        %v1839 = vunpack.c.l.bf16 %v1798
        %v1840 = vunpack.c.h.bf16 %v1798
        %v1841 = vunpack.c.l.bf16 %v1799
        %v1842 = vunpack.c.h.bf16 %v1799
        %v1843 = vunpack.c.l.bf16 %v1800
        %v1844 = vunpack.c.h.bf16 %v1800
        %v1845 = vunpack.c.l.bf16 %v1801
        %v1846 = vunpack.c.h.bf16 %v1801
        %v1847 = vsel %vm732, %v1839, 0.0
        %v1848 = vsel %vm732, %v1840, 0.0
        %v1849 = vadd.f32 %v1847, %v1848
        %v1850 = vsel %vm732, %v1841, 0.0
        %v1851 = vadd.f32 %v1849, %v1850
        %v1852 = vsel %vm732, %v1842, 0.0
        %v1853 = vadd.f32 %v1851, %v1852
        %v1854 = vsel %vm732, %v1843, 0.0
        %v1855 = vadd.f32 %v1853, %v1854
        %v1856 = vsel %vm732, %v1844, 0.0
        %v1857 = vadd.f32 %v1855, %v1856
        %v1858 = vsel %vm732, %v1845, 0.0
        %v1859 = vadd.f32 %v1857, %v1858
        %v1860 = vsel %vm732, %v1846, 0.0
        %v1861 = vadd.f32 %v1859, %v1860
        %v1862 = vrot.slane %v1861, 4
        %v1863 = vadd.f32 %v1861, %v1862
        %v1864 = vrot.slane %v1863, 2
        %v1865 = vadd.f32 %v1863, %v1864
        %v1866 = vrot.slane %v1865, 1
        %v1867 = vadd.f32 %v1865, %v1866
        %v1868 = vadd.f32 %v1531, %v1867
        %v1869 = vmul.f32 %v1839, %v1839
        %v1870 = vmul.f32 %v1840, %v1840
        %v1871 = vmul.f32 %v1841, %v1841
        %v1872 = vmul.f32 %v1842, %v1842
        %v1873 = vmul.f32 %v1843, %v1843
        %v1874 = vmul.f32 %v1844, %v1844
        %v1875 = vmul.f32 %v1845, %v1845
        %v1876 = vmul.f32 %v1846, %v1846
        %v1877 = vsel %vm732, %v1869, 0.0
        %v1878 = vsel %vm732, %v1870, 0.0
        %v1879 = vadd.f32 %v1877, %v1878
        %v1880 = vsel %vm732, %v1871, 0.0
        %v1881 = vadd.f32 %v1879, %v1880
        %v1882 = vsel %vm732, %v1872, 0.0
        %v1883 = vadd.f32 %v1881, %v1882
        %v1884 = vsel %vm732, %v1873, 0.0
        %v1885 = vadd.f32 %v1883, %v1884
        %v1886 = vsel %vm732, %v1874, 0.0
        %v1887 = vadd.f32 %v1885, %v1886
        %v1888 = vsel %vm732, %v1875, 0.0
        %v1889 = vadd.f32 %v1887, %v1888
        %v1890 = vsel %vm732, %v1876, 0.0
        %v1891 = vadd.f32 %v1889, %v1890
        %v1892 = vrot.slane %v1891, 4
        %v1893 = vadd.f32 %v1891, %v1892
        %v1894 = vrot.slane %v1893, 2
        %v1895 = vadd.f32 %v1893, %v1894
        %v1896 = vrot.slane %v1895, 1
        %v1897 = vadd.f32 %v1895, %v1896
        %v1898 = vadd.f32 %v1561, %v1897
        %v1900 = vshrl.u32 %v286, 16
        %v1902 = vrot.slane %v1900, 4
        %v1903 = vshll.u32 %v286, 16
        %v1905 = vrot.slane %v1903, 5
        %v1906 = vor.u32 %v1902, %v1905
        %v1907 = vrot.slane %v1906, 4
        %v1909 = vshll.u32 %v287, 16
        %v1911 = vrot.slane %v1909, 5
        %v1912 = vsel %vm295, %v1907, %v1911
        %1913 = vrot.lane.b32.xlu0 %v666, 4
        %v1914 = vpop.permute.xlu0 %1913
        %1915 = vrot.lane.b32.xlu0 %v667, 4
        %v1916 = vpop.permute.xlu0 %1915
        %1917 = vrot.lane.b32.xlu0 %v668, 4
        %v1918 = vpop.permute.xlu0 %1917
        %1919 = vrot.lane.b32.xlu0 %v669, 4
        %v1920 = vpop.permute.xlu0 %1919
        %1921 = vrot.lane.b32.xlu0 %v1279, 8
        %v1922 = vpop.permute.xlu0 %1921
        %1923 = vrot.lane.b32.xlu0 %v1280, 8
        %v1924 = vpop.permute.xlu0 %1923
        %1925 = vrot.lane.b32.xlu0 %v1281, 8
        %v1926 = vpop.permute.xlu0 %1925
        %1927 = vrot.lane.b32.xlu0 %v1282, 8
        %v1928 = vpop.permute.xlu0 %1927
        %1929 = vrot.lane.b32.xlu0 %v694, 12
        %v1930 = vpop.permute.xlu0 %1929
        %1931 = vrot.lane.b32.xlu0 %v695, 12
        %v1932 = vpop.permute.xlu0 %1931
        %1933 = vrot.lane.b32.xlu0 %v696, 12
        %v1934 = vpop.permute.xlu0 %1933
        %1935 = vrot.lane.b32.xlu0 %v697, 12
        %v1936 = vpop.permute.xlu0 %1935
        %1937 = vrot.lane.b32.xlu0 %v707, 16
        %v1938 = vpop.permute.xlu0 %1937
        %1939 = vrot.lane.b32.xlu0 %v708, 16
        %v1940 = vpop.permute.xlu0 %1939
        %1941 = vrot.lane.b32.xlu0 %v709, 16
        %v1942 = vpop.permute.xlu0 %1941
        %1943 = vrot.lane.b32.xlu0 %v710, 16
        %v1944 = vpop.permute.xlu0 %1943
        %1945 = vrot.lane.b32.xlu0 %v1308, 20
        %v1946 = vpop.permute.xlu0 %1945
        %1947 = vrot.lane.b32.xlu0 %v1309, 20
        %v1948 = vpop.permute.xlu0 %1947
        %1949 = vrot.lane.b32.xlu0 %v1310, 20
        %v1950 = vpop.permute.xlu0 %1949
        %1951 = vrot.lane.b32.xlu0 %v1311, 20
        %v1952 = vpop.permute.xlu0 %1951
        %1953 = vrot.lane.b32.xlu0 %v1632, 24
        %v1954 = vpop.permute.xlu0 %1953
        %1955 = vrot.lane.b32.xlu0 %v1633, 24
        %v1956 = vpop.permute.xlu0 %1955
        %1957 = vrot.lane.b32.xlu0 %v1634, 24
        %v1958 = vpop.permute.xlu0 %1957
        %1959 = vrot.lane.b32.xlu0 %v1635, 24
        %v1960 = vpop.permute.xlu0 %1959
        %1961 = vrot.lane.b32.xlu0 %v1645, 28
        %v1962 = vpop.permute.xlu0 %1961
        %1963 = vrot.lane.b32.xlu0 %v1646, 28
        %v1964 = vpop.permute.xlu0 %1963
        %1965 = vrot.lane.b32.xlu0 %v1647, 28
        %v1966 = vpop.permute.xlu0 %1965
        %1967 = vrot.lane.b32.xlu0 %v1648, 28
        %v1968 = vpop.permute.xlu0 %1967
        %v1969 = vunpack.c.l.b16 %v1912
        %v1970 = vpack.c.b16 %v1273, %v1272
        %v1971 = vpack.c.b16 %v1275, %v1274
        %v1972 = vpack.c.b16 %v1277, %v1276
        %v1973 = vpack.c.b16 %v1969, %v1278
        %1974 = vrot.lane.b32.xlu0 %v1970, 32
        %v1975 = vpop.permute.xlu0 %1974
        %1976 = vrot.lane.b32.xlu0 %v1971, 32
        %v1977 = vpop.permute.xlu0 %1976
        %1978 = vrot.lane.b32.xlu0 %v1972, 32
        %v1979 = vpop.permute.xlu0 %1978
        %1980 = vrot.lane.b32.xlu0 %v1973, 32
        %v1981 = vpop.permute.xlu0 %1980
        %v1984 = vsel %vm719, %v646, %v1914
        %v1987 = vsel %vm719, %v647, %v1916
        %v1990 = vsel %vm719, %v648, %v1918
        %v1993 = vsel %vm719, %v649, %v1920
        %v1995 = vsel %vm732, %v1984, %v1922
        %v1997 = vsel %vm732, %v1987, %v1924
        %v1999 = vsel %vm732, %v1990, %v1926
        %v2001 = vsel %vm732, %v1993, %v1928
        %v2003 = vsel %vm741, %v1995, %v1930
        %v2005 = vsel %vm741, %v1997, %v1932
        %v2007 = vsel %vm741, %v1999, %v1934
        %v2009 = vsel %vm741, %v2001, %v1936
        %v2011 = vsel %vm750, %v2003, %v1938
        %v2013 = vsel %vm750, %v2005, %v1940
        %v2015 = vsel %vm750, %v2007, %v1942
        %v2017 = vsel %vm750, %v2009, %v1944
        %v2019 = vsel %vm759, %v2011, %v1946
        %v2021 = vsel %vm759, %v2013, %v1948
        %v2023 = vsel %vm759, %v2015, %v1950
        %v2025 = vsel %vm759, %v2017, %v1952
        %v2027 = vsel %vm768, %v2019, %v1954
        %v2029 = vsel %vm768, %v2021, %v1956
        %v2031 = vsel %vm768, %v2023, %v1958
        %v2033 = vsel %vm768, %v2025, %v1960
        %v2035 = vsel %vm777, %v2027, %v1962
        %v2037 = vsel %vm777, %v2029, %v1964
        %v2039 = vsel %vm777, %v2031, %v1966
        %v2041 = vsel %vm777, %v2033, %v1968
        %v2043 = vsel %vm786, %v2035, %v1975
        %v2045 = vsel %vm786, %v2037, %v1977
        %v2047 = vsel %vm786, %v2039, %v1979
        %v2049 = vsel %vm786, %v2041, %v1981
        %v2050 = vsel %vm810, %v2043, 0
        %v2052 = vsel %vm810, %v2045, 0
        %v2054 = vsel %vm810, %v2047, 0
        %v2056 = vsel %vm810, %v2049, 0
        %2058 = vmatprep.subr.bf16.mxu0 0
        %2059 = vmatpush1.bf16.msra.mxu0 %v805
        %2060 = vmatprep.subr.bf16.mxu0 0
        %2061 = vmatpush1.bf16.msra.mxu0 %v806
        %2062 = vmatprep.subr.bf16.mxu0 0
        %2063 = vmatpush1.bf16.msra.mxu0 %v821
        %2064 = vmatprep.subr.bf16.mxu0 0
        %2065 = vmatpush1.bf16.msra.mxu0 0
        %2066 = vmatprep.subr.bf16.mxu0 0
        %2067 = vmatpush1.bf16.msra.mxu0 0
        %2068 = vmatprep.subr.bf16.mxu0 0
        %2069 = vmatpush1.bf16.msra.mxu0 0
        %2070 = vmatprep.subr.bf16.mxu0 0
        %2071 = vmatpush1.bf16.msra.mxu0 0
        %2072 = vmatprep.subr.bf16.mxu0 0
        %2073 = vmatpush1.bf16.msra.mxu0 0
        %2074 = vmatprep.subr.bf16.mxu0 0
        %2075 = vmatpush1.bf16.msra.mxu0 0
        %2076 = vmatprep.subr.bf16.mxu0 0
        %2077 = vmatpush1.bf16.msra.mxu0 0
        %2078 = vmatprep.subr.bf16.mxu0 0
        %2079 = vmatpush1.bf16.msra.mxu0 0
        %2080 = vmatprep.subr.bf16.mxu0 0
        %2081 = vmatpush1.bf16.msra.mxu0 0
        %2082 = vmatprep.subr.bf16.mxu0 0
        %2083 = vmatpush1.bf16.msra.mxu0 0
        %2084 = vmatprep.subr.bf16.mxu0 0
        %2085 = vmatpush1.bf16.msra.mxu0 0
        %2086 = vmatprep.subr.bf16.mxu0 0
        %2087 = vmatpush1.bf16.msra.mxu0 0
        %2088 = vmatprep.subr.bf16.mxu0 0
        %2089 = vmatpush1.bf16.msra.mxu0 0
        %2090 = vmatprep.mubr.bf16.mxu0 0
        %2091 = vmatmul.mubr.bf16.gmra.mrb[0].mxu0 %v2050
        %v2092 = vpop.f32.mrb[0].mxu0
        %v2093 = vadd.f32 0.0, %v2092
        %v2094 = vpop.f32.mrb[0].mxu0
        %v2095 = vpop.f32.mrb[0].mxu0
        %v2096 = vadd.f32 0.0, %v2095
        %v2097 = vpop.f32.mrb[0].mxu0
        %2098 = vmatprep.mubr.bf16.mxu0 0
        %2099 = vmatmul.mubr.bf16.gmra.mrb[0].mxu0 %v2052
        %v2100 = vpop.f32.mrb[0].mxu0
        %v2101 = vadd.f32 0.0, %v2100
        %v2102 = vpop.f32.mrb[0].mxu0
        %v2103 = vpop.f32.mrb[0].mxu0
        %v2104 = vadd.f32 0.0, %v2103
        %v2105 = vpop.f32.mrb[0].mxu0
        %2106 = vmatprep.mubr.bf16.mxu0 0
        %2107 = vmatmul.mubr.bf16.gmra.mrb[0].mxu0 %v2054
        %v2108 = vpop.f32.mrb[0].mxu0
        %v2109 = vadd.f32 0.0, %v2108
        %v2110 = vpop.f32.mrb[0].mxu0
        %v2111 = vpop.f32.mrb[0].mxu0
        %v2112 = vadd.f32 0.0, %v2111
        %v2113 = vpop.f32.mrb[0].mxu0
        %2114 = vmatprep.mubr.bf16.mxu0 0
        %2115 = vmatmul.mubr.bf16.gmra.mrb[0].mxu0 %v2056
        %v2116 = vpop.f32.mrb[0].mxu0
        %v2117 = vadd.f32 0.0, %v2116
        %v2118 = vpop.f32.mrb[0].mxu0
        %v2119 = vpop.f32.mrb[0].mxu0
        %v2120 = vadd.f32 0.0, %v2119
        %v2121 = vpop.f32.mrb[0].mxu0
        %2122 = vdwg.mxu0
        %v2123 = vpack.c.bf16 %v2096, %v2093
        %v2124 = vpack.c.bf16 %v2104, %v2101
        %v2125 = vpack.c.bf16 %v2112, %v2109
        %v2126 = vpack.c.bf16 %v2120, %v2117
        %v2131 = vunpack.c.l.b16 %v2123
        %v2132 = vunpack.c.h.b16 %v2123
        %v2133 = vunpack.c.l.b16 %v2124
        %v2134 = vunpack.c.h.b16 %v2124
        %v2135 = vunpack.c.l.b16 %v2125
        %v2136 = vunpack.c.h.b16 %v2125
        %v2137 = vunpack.c.l.b16 %v2126
        %v2138 = vunpack.c.h.b16 %v2126
        %v2139 = vpack.c.b16 %v2131, %v2131
        %v2140 = vpack.c.b16 %v2132, %v2132
        %v2141 = vpack.c.b16 %v2133, %v2133
        %v2142 = vpack.c.b16 %v2134, %v2134
        %v2143 = vpack.c.b16 %v2135, %v2135
        %v2144 = vpack.c.b16 %v2136, %v2136
        %v2145 = vpack.c.b16 %v2137, %v2137
        %v2146 = vpack.c.b16 %v2138, %v2138
        %s2155 = scalar_lea.vmem %s207, 96 [#allocation7]
        %2156 = vst.msk [vmem:[%s2155] sm:$0xf] %vm920, %v2139
        %2157 = vst.msk [vmem:[%s2155 + $0x4] sm:$0xf] %vm920, %v2140
        %2158 = vst.msk [vmem:[%s2155 + $0x8] sm:$0xf] %vm920, %v2141
        %2159 = vst.msk [vmem:[%s2155 + $0xc] sm:$0xf] %vm920, %v2142
        %2160 = vst.msk [vmem:[%s2155 + $0x10] sm:$0xf] %vm920, %v2143
        %2161 = vst.msk [vmem:[%s2155 + $0x14] sm:$0xf] %vm920, %v2144
        %2162 = vst.msk [vmem:[%s2155 + $0x18] sm:$0xf] %vm920, %v2145
        %2163 = vst.msk [vmem:[%s2155 + $0x1c] sm:$0xf] %vm920, %v2146
        %v2164 = vunpack.c.l.bf16 %v2123
        %v2165 = vunpack.c.h.bf16 %v2123
        %v2166 = vunpack.c.l.bf16 %v2124
        %v2167 = vunpack.c.h.bf16 %v2124
        %v2168 = vunpack.c.l.bf16 %v2125
        %v2169 = vunpack.c.h.bf16 %v2125
        %v2170 = vunpack.c.l.bf16 %v2126
        %v2171 = vunpack.c.h.bf16 %v2126
        %v2172 = vsel %vm732, %v2164, 0.0
        %v2173 = vsel %vm732, %v2165, 0.0
        %v2174 = vadd.f32 %v2172, %v2173
        %v2175 = vsel %vm732, %v2166, 0.0
        %v2176 = vadd.f32 %v2174, %v2175
        %v2177 = vsel %vm732, %v2167, 0.0
        %v2178 = vadd.f32 %v2176, %v2177
        %v2179 = vsel %vm732, %v2168, 0.0
        %v2180 = vadd.f32 %v2178, %v2179
        %v2181 = vsel %vm732, %v2169, 0.0
        %v2182 = vadd.f32 %v2180, %v2181
        %v2183 = vsel %vm732, %v2170, 0.0
        %v2184 = vadd.f32 %v2182, %v2183
        %v2185 = vsel %vm732, %v2171, 0.0
        %v2186 = vadd.f32 %v2184, %v2185
        %v2187 = vrot.slane %v2186, 4
        %v2188 = vadd.f32 %v2186, %v2187
        %v2189 = vrot.slane %v2188, 2
        %v2190 = vadd.f32 %v2188, %v2189
        %v2191 = vrot.slane %v2190, 1
        %v2192 = vadd.f32 %v2190, %v2191
        %v2193 = vadd.f32 %v1868, %v2192
        %v2194 = vmul.f32 %v2164, %v2164
        %v2195 = vmul.f32 %v2165, %v2165
        %v2196 = vmul.f32 %v2166, %v2166
        %v2197 = vmul.f32 %v2167, %v2167
        %v2198 = vmul.f32 %v2168, %v2168
        %v2199 = vmul.f32 %v2169, %v2169
        %v2200 = vmul.f32 %v2170, %v2170
        %v2201 = vmul.f32 %v2171, %v2171
        %v2202 = vsel %vm732, %v2194, 0.0
        %v2203 = vsel %vm732, %v2195, 0.0
        %v2204 = vadd.f32 %v2202, %v2203
        %v2205 = vsel %vm732, %v2196, 0.0
        %v2206 = vadd.f32 %v2204, %v2205
        %v2207 = vsel %vm732, %v2197, 0.0
        %v2208 = vadd.f32 %v2206, %v2207
        %v2209 = vsel %vm732, %v2198, 0.0
        %v2210 = vadd.f32 %v2208, %v2209
        %v2211 = vsel %vm732, %v2199, 0.0
        %v2212 = vadd.f32 %v2210, %v2211
        %v2213 = vsel %vm732, %v2200, 0.0
        %v2214 = vadd.f32 %v2212, %v2213
        %v2215 = vsel %vm732, %v2201, 0.0
        %v2216 = vadd.f32 %v2214, %v2215
        %v2217 = vrot.slane %v2216, 4
        %v2218 = vadd.f32 %v2216, %v2217
        %v2219 = vrot.slane %v2218, 2
        %v2220 = vadd.f32 %v2218, %v2219
        %v2221 = vrot.slane %v2220, 1
        %v2222 = vadd.f32 %v2220, %v2221
        %v2223 = vadd.f32 %v1898, %v2222
        %vm2224 = vcmask 57344
        %2225 = vst.msk [vmem:[%s214] sm:$0x1] %vm2224, %v2193
        %2226 = vst.msk [vmem:[%s214 + $0x1] sm:$0x1] %vm2224, %v2223
        %s2227 = sand.u32 %s80, 1
        %s2228 = scalar_lea.sflag [#allocation4], %s2227
        %s2229 = sand.u32 %s80, 1
        %s2230 = smul.addr %s2229, 128
        %s2231 = scalar_lea.vmem [#allocation7], %s2230
        %s2232 = sand.u32 %s106, 1
        %s2233 = scalar_lea.sflag [#allocation9], %s2232
        %s2234 = sand.u32 %s106, 1
        %s2235 = smul.addr %s2234, 2
        %s2236 = scalar_lea.vmem [#allocation8], %s2235
        // Predicated region
        $region37: #{tpu_custom_call.1} parent=27 // pred_check
          %p2237 = pneg %p90
        $region38: #{tpu_custom_call.1} parent=27 // pred_check_branch
          %2239 = sbr.rel (%p2237) target = $region40
        $region39: #{tpu_custom_call.1} parent=27 // pred_region
          %s2241 = ssub.s32 2048, 2048
          %2242 = vsyncadd %s2228, %s2241
          %s2243 = smul.addr %s25, 32
          %s2244 = smul.addr %s2243, 64
          %s2245 = scalar_lea.hbm %s2, %s2244
          %s2246 = sshll.u32 %s2231, 4
          %s2247 = int_to_ptr.vmem [resolvable:$true] %s2246
          %2252 = dma.vmem_to_hbm [thread:$0]  %s2247, 2048, %s2245, %s2228, 64, 64, 4
        $region40: #{tpu_custom_call.1} parent=27 // pred_fallthru
          _
        // Predicated region
        $region41: #{tpu_custom_call.1} parent=27 // pred_check
          %p2253 = pneg %p116
        $region42: #{tpu_custom_call.1} parent=27 // pred_check_branch
          %2255 = sbr.rel (%p2253) target = $region44
        $region43: #{tpu_custom_call.1} parent=27 // pred_region
          %s2257 = ssub.s32 32, 32
          %2258 = vsyncadd %s2233, %s2257
          %s2259 = smul.addr %s25, 32
          %s2260 = scalar_lea.hbm %s3, %s2259
          %s2262 = sshll.u32 %s2236, 4
          %s2263 = int_to_ptr.vmem [resolvable:$true] %s2262
          %2265 = dma.vmem_to_hbm [thread:$0]  %s2263, 32, %s2260, %s2233
        $region44: #{tpu_custom_call.1} parent=27 // pred_fallthru
          _
      $region28: #{tpu_custom_call.1} parent=5 // pred_fallthru
        _
      %p2266 = scmp.le.s32.totalorder 2, %s20
      // Predicated region
      $region45: #{tpu_custom_call.1} parent=5 // pred_check
        %p2267 = pneg %p2266
      $region46: #{tpu_custom_call.1} parent=5 // pred_check_branch
        %2269 = sbr.rel (%p2267) target = $region48
      $region47: #{tpu_custom_call.1} parent=5 // pred_region
        %s2270 = ssub.s32 %s20, 2
        // Predicated region
        $region49: #{tpu_custom_call.1} parent=47 // pred_check
          %p2271 = pneg %p96
        $region50: #{tpu_custom_call.1} parent=47 // pred_check_branch
          %2273 = sbr.rel (%p2271) target = $region52
        $region51: #{tpu_custom_call.1} parent=47 // pred_region
          %s2274 = sand.u32 %s81, 1
          %s2275 = scalar_lea.sflag [#allocation4], %s2274
          %s2276 = sand.u32 %s81, 1
          %s2277 = smul.addr %s2276, 128
          %s2278 = scalar_lea.vmem [#allocation7], %s2277
          %2279 = dma.done %s2275, 2048
        $region52: #{tpu_custom_call.1} parent=47 // pred_fallthru
          _
        // Predicated region
        $region53: #{tpu_custom_call.1} parent=47 // pred_check
          %p2280 = pneg %p122
        $region54: #{tpu_custom_call.1} parent=47 // pred_check_branch
          %2282 = sbr.rel (%p2280) target = $region56
        $region55: #{tpu_custom_call.1} parent=47 // pred_region
          %s2283 = sand.u32 %s107, 1
          %s2284 = scalar_lea.sflag [#allocation9], %s2283
          %s2285 = sand.u32 %s107, 1
          %s2286 = smul.addr %s2285, 2
          %s2287 = scalar_lea.vmem [#allocation8], %s2286
          %2288 = dma.done %s2284, 32
        $region56: #{tpu_custom_call.1} parent=47 // pred_fallthru
          _
      $region48: #{tpu_custom_call.1} parent=5 // pred_fallthru
        _
    $region6: #{tpu_custom_call.1} parent=1 // loop_footer
      %s24 = sadd.s32 1, %s20
    $region7: #{tpu_custom_call.1} parent=1 // loop_footer_branch
      %19 = sbr.rel target = $region3
    $region8: #{tpu_custom_call.1} parent=1 // loop_exit
      _
    %2289 = vsyncpa [#allocation3], 1
    %s2290 = scalar_lea.sflag [#allocation3], 1
    %2291 = vsyncpa %s2290, 1
    %2292 = vsyncpa [#allocation6], 1
    %2293 = vsyncpa [#allocation4], 1
    %s2294 = scalar_lea.sflag [#allocation4], 1
    %2295 = vsyncpa %s2294, 1
    %2296 = vsyncpa [#allocation9], 1
    %s2297 = scalar_lea.sflag [#allocation9], 1
    %2298 = vsyncpa %s2297, 1

</llo_original>
